<compile_context>
chip_gen: v5e
topology: v5e:2x2
jax: 0.10.0
libtpu: 0.0.40
codegen_flags: <defaults>
</compile_context>

<pallas_src>
import functools

import jax
import jax.numpy as jnp
from jax import lax
from jax.experimental import pallas as pl
from jax.experimental.pallas import tpu as pltpu

# ---- scaled-down dimensions (see header comment) ----
B, N = 2, 256                 # batch, n_pts
CIN = 16                      # stands for 2500*3 + num_p = 7503
C1, C2, C3 = 128, 128, 128    # stand for 3126, 2048, 1024
C4 = 64                       # stands for 512 (STN fc1 output)
K = 3                         # stands for 21
KK = K * K                    # stands for 441
KK_PAD = 128                  # fc2 output padded to one full lane tile
TP = 128                      # point-tile size (sublane axis)
EPS = 1e-5
NEG_INF = float("-inf")


# -------------------- Pallas kernel --------------------

def pointnetfeat_kernel(x_ref,
                        w1_ref, t1_ref,
                        fw2_ref, ft2_ref, fw3_ref, ft3_ref,
                        sw2_ref, st2_ref, sw3_ref, st3_ref,
                        hw4_ref, ht4_ref, hw5_ref, hb5_ref,
                        g_ref, trans_ref, gstn_ref, *, n_pts):
    """Fused feature trunk + STN trunk + STN fc head (one point tile / call).

    x_ref: (1, TP, CIN) bf16 -- points on sublanes, channels on lanes.
    Trunk weights are pre-transposed, BN-scale-folded bf16 (cin, cout);
    shifts are f32 (1, cout) -> lane broadcast.  w1/t1 are the layer-1
    weights of BOTH trunks concatenated along cout (shared input).
    g_ref / trans_ref: (1, 1, C3) / (1, 1, KK_PAD) f32, revisited across the
    point-tile (arbitrary) grid axis -> VMEM-resident accumulators.
    """
    pt = pl.program_id(1)
    n_tiles = pl.num_programs(1)

    def layer(h, w_ref, t_ref, relu, keep_f32=False):
        # conv1d(k=1)/fc as matmul: bf16 MXU inputs, f32 accumulate + epilogue,
        # intermediates cast back to bf16 once (next layer's astype is a no-op).
        acc = jnp.dot(h.astype(jnp.bfloat16), w_ref[...],
                      preferred_element_type=jnp.float32)
        acc = acc + t_ref[...]                     # folded-BN shift
        if relu:
            acc = jnp.maximum(acc, 0.0)
        return acc if keep_f32 else acc.astype(jnp.bfloat16)

    # Running-max accumulator init on the first point tile of each batch.
    @pl.when(pt == 0)
    def _():
        g_ref[...] = jnp.full(g_ref.shape, NEG_INF, dtype=g_ref.dtype)
        gstn_ref[...] = jnp.full(gstn_ref.shape, NEG_INF, dtype=gstn_ref.dtype)

    xb = x_ref[0]                                  # (TP, CIN) bf16

    # Layer 1 of both trunks fused into one 2*C1-lane matmul, split at a
    # 128-lane tile boundary.
    h1 = layer(xb, w1_ref, t1_ref, relu=True)      # (TP, 2*C1) bf16
    hf = h1[:, :C1]                                # feature-trunk branch
    hs = h1[:, C1:]                                # STN-trunk branch

    # Mask padded point rows (n_pts may not be a multiple of TP) before pooling.
    row = lax.broadcasted_iota(jnp.int32, (TP, 1), 0) + pt * TP
    valid = row < n_pts

    # Feature trunk: relu(bn2(conv2)), bn3(conv3) [no relu] -> running max.
    f3 = layer(layer(hf, fw2_ref, ft2_ref, relu=True),
               fw3_ref, ft3_ref, relu=False, keep_f32=True)      # (TP, C3) f32
    g_ref[0] = jnp.maximum(
        g_ref[0],
        jnp.max(jnp.where(valid, f3, NEG_INF), axis=0, keepdims=True))

    # STN trunk: ReLU on all three layers -> running max.
    s3 = layer(layer(hs, sw2_ref, st2_ref, relu=True),
               sw3_ref, st3_ref, relu=True, keep_f32=True)        # (TP, C3) f32
    gstn_ref[...] = jnp.maximum(
        gstn_ref[...],
        jnp.max(jnp.where(valid, s3, NEG_INF), axis=0, keepdims=True))

    # STN fc head epilogue once pooling over all point tiles is finished:
    # relu(bn4(fc1)), then fc2 with the flattened identity folded into its bias
    # (output zero-padded to KK_PAD lanes; sliced on the host).
    @pl.when(pt == n_tiles - 1)
    def _():
        h4 = layer(gstn_ref[...], hw4_ref, ht4_ref, relu=True)    # (1, C4)
        trans_ref[0] = layer(h4, hw5_ref, hb5_ref, relu=False, keep_f32=True)


def pointnetfeat_forward(x, params):
    """x: (B, CIN, N) f32 in PyTorch Conv1d NCW layout. Returns (g, trans)."""
    b, cin, n = x.shape
    n_tiles = pl.cdiv(n, TP)
    n_pad = n_tiles * TP

    # Layout plumbing only: channels -> lanes, points -> sublanes, bf16 at the
    # kernel boundary (transpose + cast fuse into one pass; halves input DMA).
    xt = jnp.transpose(x, (0, 2, 1)).astype(jnp.bfloat16)        # (B, N, CIN)
    if n_pad != n:
        xt = jnp.pad(xt, ((0, 0), (0, n_pad - n), (0, 0)))

    fw1, ft1, fw2, ft2, fw3, ft3 = params["feat_trunk"]
    sw1, st1, sw2, st2, sw3, st3 = params["stn_trunk"]
    hw4, ht4, hw5, hb5 = params["stn_head"]
    # Fuse layer 1 of the two trunks (same input xb) into one matmul.
    w1 = jnp.concatenate([fw1, sw1], axis=1)                      # (CIN, 2*C1)
    t1 = jnp.concatenate([ft1, st1], axis=1)                      # (1, 2*C1)
    weights = (w1, t1, fw2, ft2, fw3, ft3, sw2, st2, sw3, st3,
               hw4, ht4, hw5, hb5)

    def const_spec(arr):
        # Grid-invariant block (index_map always (0, 0)): fetched once, held
        # VMEM-resident across the whole grid.
        return pl.BlockSpec(arr.shape, lambda i, j: (0, 0))

    flops = (2 * b * n_pad * (CIN * 2 * C1 + 2 * C1 * C2 + 2 * C2 * C3)
             + 2 * b * (C3 * C4 + C4 * KK_PAD))
    bytes_accessed = (xt.size * xt.dtype.itemsize
                      + sum(w.size * w.dtype.itemsize for w in weights)
                      + b * (C3 + KK_PAD) * 4)

    g3, trans3 = pl.pallas_call(
        functools.partial(pointnetfeat_kernel, n_pts=n),
        out_shape=(jax.ShapeDtypeStruct((b, 1, C3), jnp.float32),
                   jax.ShapeDtypeStruct((b, 1, KK_PAD), jnp.float32)),
        grid_spec=pltpu.PrefetchScalarGridSpec(
            num_scalar_prefetch=0,
            grid=(b, n_tiles),                    # batch parallel, points last
            in_specs=[pl.BlockSpec((1, TP, CIN), lambda i, j: (i, j, 0))]
                     + [const_spec(w) for w in weights],
            out_specs=[pl.BlockSpec((1, 1, C3), lambda i, j: (i, 0, 0)),
                       pl.BlockSpec((1, 1, KK_PAD), lambda i, j: (i, 0, 0))],
            scratch_shapes=[pltpu.VMEM((1, C3), jnp.float32)]),
        compiler_params=pltpu.CompilerParams(
            dimension_semantics=("parallel", "arbitrary"),
            vmem_limit_bytes=48 * 1024 * 1024),
        cost_estimate=pl.CostEstimate(flops=flops, transcendentals=0,
                                      bytes_accessed=bytes_accessed),
    )(xt, *weights)

    g = g3[:, 0, :]
    trans = trans3[:, 0, :KK].reshape(b, K, K)
    return g, trans


# -------------------- parameters (deterministic, synthetic) --------------------

def make_params(key):
    keys = iter(jax.random.split(key, 64))
    nxt = lambda: next(keys)

    def folded_conv_bn(cout, cin):
        """Conv1d(k=1)/Linear + BN folded: (W'^T bf16 (cin,cout), shift f32 (1,cout))."""
        w = jax.random.normal(nxt(), (cout, cin), jnp.float32) / jnp.sqrt(cin)
        bias = 0.1 * jax.random.normal(nxt(), (cout,), jnp.float32)
        gamma = jax.random.uniform(nxt(), (cout,), jnp.float32, 0.5, 1.5)
        beta = 0.1 * jax.random.normal(nxt(), (cout,), jnp.float32)
        mean = 0.1 * jax.random.normal(nxt(), (cout,), jnp.float32)
        var = jax.random.uniform(nxt(), (cout,), jnp.float32, 0.5, 1.5)
        scale = gamma / jnp.sqrt(var + EPS)
        shift = (bias - mean) * scale + beta
        w_folded_t = (scale[:, None] * w).T.astype(jnp.bfloat16)
        return w_folded_t, shift.reshape(1, cout)

    def trunk():
        return (folded_conv_bn(C1, CIN)
                + folded_conv_bn(C2, C1)
                + folded_conv_bn(C3, C2))

    feat_trunk = trunk()     # PointNetfeat.conv1/2/3 + bn1/2/3
    stn_trunk = trunk()      # STN3D.conv1/2/3 + bn1/2/3

    # STN head: fc1 + bn4 (+relu); fc2 + flattened identity, zero-padded to 128 lanes.
    w4t, t4 = folded_conv_bn(C4, C3)
    wf2 = jax.random.normal(nxt(), (KK, C4), jnp.float32) / jnp.sqrt(C4)
    bf2 = 0.1 * jax.random.normal(nxt(), (KK,), jnp.float32)
    iden = jnp.eye(K, dtype=jnp.float32).reshape(-1)   # idearr identity, flat
    w5t = jnp.zeros((C4, KK_PAD), jnp.float32).at[:, :KK].set(wf2.T).astype(jnp.bfloat16)
    b5 = jnp.zeros((1, KK_PAD), jnp.float32).at[0, :KK].set(bf2 + iden)
    stn_head = (w4t, t4, w5t, b5)
    # NOTE: STN3D.fc3 / bn5 are defined in __init__ but never used in forward -> omitted.
    return {"feat_trunk": feat_trunk, "stn_trunk": stn_trunk, "stn_head": stn_head}


# -------------------- pure-JAX reference (same bf16 MXU-input convention) -----

def _ref_forward(x, params):
    b, cin, n = x.shape
    xt = jnp.transpose(x, (0, 2, 1)).reshape(b * n, cin).astype(jnp.bfloat16)

    def layer(h, w, t, relu, keep_f32=False):
        acc = jnp.dot(h.astype(jnp.bfloat16), w,
                      preferred_element_type=jnp.float32) + t
        if relu:
            acc = jnp.maximum(acc, 0.0)
        return acc if keep_f32 else acc.astype(jnp.bfloat16)

    def trunk(p, final_relu):
        w1, t1, w2, t2, w3, t3 = p
        h = layer(xt, w1, t1, True)
        h = layer(h, w2, t2, True)
        h = layer(h, w3, t3, final_relu, keep_f32=True)
        return jnp.max(h.reshape(b, n, -1), axis=1)

    g = trunk(params["feat_trunk"], False)
    g_stn = trunk(params["stn_trunk"], True)
    w4t, t4, w5t, b5 = params["stn_head"]
    h = layer(g_stn, w4t, t4, True)
    trans = layer(h, w5t, b5, False, keep_f32=True)[:, :KK].reshape(b, K, K)
    return g, trans


if __name__ == "__main__":
    key = jax.random.PRNGKey(0)
    kx, kp = jax.random.split(key)
    x = jax.random.normal(kx, (B, CIN, N), jnp.float32)   # (batch, channels, points), NCW
    params = make_params(kp)

    g, trans = pointnetfeat_forward(x, params)
    jax.block_until_ready((g, trans))

    assert g.shape == (B, C3) and g.dtype == jnp.float32
    assert trans.shape == (B, K, K) and trans.dtype == jnp.float32

    g_ref, trans_ref = _ref_forward(x, params)
    assert jnp.allclose(g, g_ref, rtol=1e-2, atol=1e-2), float(jnp.abs(g - g_ref).max())
    assert jnp.allclose(trans, trans_ref, rtol=1e-2, atol=1e-2), \
        float(jnp.abs(trans - trans_ref).max())

    print("KERNEL_OK")
</pallas_src>

<mosaic_0001>
module attributes {stable_mosaic.version = 11 : i64} {
  func.func @pointnetfeat_kernel(%arg0: i32, %arg1: i32, %arg2: memref<1x128x16xbf16, #tpu.memory_space<vmem>>, %arg3: memref<16x256xbf16, #tpu.memory_space<vmem>>, %arg4: memref<1x256xf32, #tpu.memory_space<vmem>>, %arg5: memref<128x128xbf16, #tpu.memory_space<vmem>>, %arg6: memref<1x128xf32, #tpu.memory_space<vmem>>, %arg7: memref<128x128xbf16, #tpu.memory_space<vmem>>, %arg8: memref<1x128xf32, #tpu.memory_space<vmem>>, %arg9: memref<128x128xbf16, #tpu.memory_space<vmem>>, %arg10: memref<1x128xf32, #tpu.memory_space<vmem>>, %arg11: memref<128x128xbf16, #tpu.memory_space<vmem>>, %arg12: memref<1x128xf32, #tpu.memory_space<vmem>>, %arg13: memref<128x64xbf16, #tpu.memory_space<vmem>>, %arg14: memref<1x64xf32, #tpu.memory_space<vmem>>, %arg15: memref<64x128xbf16, #tpu.memory_space<vmem>>, %arg16: memref<1x128xf32, #tpu.memory_space<vmem>>, %arg17: memref<1x1x128xf32, #tpu.memory_space<vmem>>, %arg18: memref<1x1x128xf32, #tpu.memory_space<vmem>>, %arg19: memref<1x128xf32, #tpu.memory_space<vmem>>) attributes {dimension_semantics = [#tpu.dimension_semantics<parallel>, #tpu.dimension_semantics<arbitrary>], iteration_bounds = array<i64: 2, 2>, scalar_prefetch = 0 : i64, scratch_operands = 1 : i64, tpu.core_type = #tpu.core_type<tc>, window_params = [{transform_indices = @transform_0, window_bounds = array<i64: 1, 128, 16>}, {pipeline_mode = #tpu.pipeline_mode<synchronous>, transform_indices = @transform_1, window_bounds = array<i64: 16, 256>}, {pipeline_mode = #tpu.pipeline_mode<synchronous>, transform_indices = @transform_2, window_bounds = array<i64: 1, 256>}, {pipeline_mode = #tpu.pipeline_mode<synchronous>, transform_indices = @transform_3, window_bounds = array<i64: 128, 128>}, {pipeline_mode = #tpu.pipeline_mode<synchronous>, transform_indices = @transform_4, window_bounds = array<i64: 1, 128>}, {pipeline_mode = #tpu.pipeline_mode<synchronous>, transform_indices = @transform_5, window_bounds = array<i64: 128, 128>}, {pipeline_mode = #tpu.pipeline_mode<synchronous>, transform_indices = @transform_6, window_bounds = array<i64: 1, 128>}, {pipeline_mode = #tpu.pipeline_mode<synchronous>, transform_indices = @transform_7, window_bounds = array<i64: 128, 128>}, {pipeline_mode = #tpu.pipeline_mode<synchronous>, transform_indices = @transform_8, window_bounds = array<i64: 1, 128>}, {pipeline_mode = #tpu.pipeline_mode<synchronous>, transform_indices = @transform_9, window_bounds = array<i64: 128, 128>}, {pipeline_mode = #tpu.pipeline_mode<synchronous>, transform_indices = @transform_10, window_bounds = array<i64: 1, 128>}, {pipeline_mode = #tpu.pipeline_mode<synchronous>, transform_indices = @transform_11, window_bounds = array<i64: 128, 64>}, {pipeline_mode = #tpu.pipeline_mode<synchronous>, transform_indices = @transform_12, window_bounds = array<i64: 1, 64>}, {pipeline_mode = #tpu.pipeline_mode<synchronous>, transform_indices = @transform_13, window_bounds = array<i64: 64, 128>}, {pipeline_mode = #tpu.pipeline_mode<synchronous>, transform_indices = @transform_14, window_bounds = array<i64: 1, 128>}, {transform_indices = @transform_15, window_bounds = array<i64: 1, 1, 128>}, {transform_indices = @transform_16, window_bounds = array<i64: 1, 1, 128>}]} {
    %c0_i32 = arith.constant 0 : i32
    %0 = arith.cmpi eq, %arg1, %c0_i32 : i32
    %1 = arith.extui %0 : i1 to i32
    %c0_i32_0 = arith.constant 0 : i32
    %2 = arith.cmpi ne, %1, %c0_i32_0 : i32
    scf.if %2 {
      %cst_46 = arith.constant 0xFF800000 : f32
      %73 = vector.broadcast %cst_46 : f32 to vector<1x1x128xf32>
      %c0_47 = arith.constant 0 : index
      %c0_48 = arith.constant 0 : index
      %c0_49 = arith.constant 0 : index
      %74 = vector.load %arg17[%c0_47, %c0_48, %c0_49] : memref<1x1x128xf32, #tpu.memory_space<vmem>>, vector<1x1x128xf32>
      tpu.vector_store %arg17[%c0_47, %c0_48, %c0_49], %73 {strides = array<i32>} : memref<1x1x128xf32, #tpu.memory_space<vmem>>, vector<1x1x128xf32>,
      %cst_50 = arith.constant 0xFF800000 : f32
      %75 = vector.broadcast %cst_50 : f32 to vector<1x128xf32>
      %c0_51 = arith.constant 0 : index
      %c0_52 = arith.constant 0 : index
      %76 = vector.load %arg19[%c0_51, %c0_52] : memref<1x128xf32, #tpu.memory_space<vmem>>, vector<1x128xf32>
      tpu.vector_store %arg19[%c0_51, %c0_52], %75 {strides = array<i32>} : memref<1x128xf32, #tpu.memory_space<vmem>>, vector<1x128xf32>,
    } else {
    }
    %c0 = arith.constant 0 : index
    %c0_1 = arith.constant 0 : index
    %c0_2 = arith.constant 0 : index
    %3 = vector.load %arg2[%c0, %c0_1, %c0_2] : memref<1x128x16xbf16, #tpu.memory_space<vmem>>, vector<1x128x16xbf16>
    %4 = vector.shape_cast %3 : vector<1x128x16xbf16> to vector<128x16xbf16>
    %c0_3 = arith.constant 0 : index
    %c0_4 = arith.constant 0 : index
    %5 = vector.load %arg3[%c0_3, %c0_4] : memref<16x256xbf16, #tpu.memory_space<vmem>>, vector<16x256xbf16>
    %cst = arith.constant dense<0.000000e+00> : vector<128x256xf32>
    %6 = tpu.matmul %4, %5, %cst {dimension_numbers = #tpu.dot_dimension_numbers<[1], [0], [0], [1], [0, 0, 1, 1], [], []>} : vector<128x16xbf16>, vector<16x256xbf16>, vector<128x256xf32> -> vector<128x256xf32>
    %c0_5 = arith.constant 0 : index
    %c0_6 = arith.constant 0 : index
    %7 = vector.load %arg4[%c0_5, %c0_6] : memref<1x256xf32, #tpu.memory_space<vmem>>, vector<1x256xf32>
    %8 = vector.broadcast %7 : vector<1x256xf32> to vector<128x256xf32>
    %9 = arith.addf %6, %8 : vector<128x256xf32>
    %cst_7 = arith.constant 0.000000e+00 : f32
    %10 = vector.broadcast %cst_7 : f32 to vector<128x256xf32>
    %11 = arith.maximumf %9, %10 : vector<128x256xf32>
    %12 = arith.truncf %11 : vector<128x256xf32> to vector<128x256xbf16>
    %13 = vector.extract_strided_slice %12 {offsets = [0, 0], sizes = [128, 128], strides = [1, 1]} : vector<128x256xbf16> to vector<128x128xbf16>
    %14 = vector.extract_strided_slice %12 {offsets = [0, 128], sizes = [128, 128], strides = [1, 1]} : vector<128x256xbf16> to vector<128x128xbf16>
    %15 = tpu.iota {dimensions = array<i32: 0>} : vector<128x1xi32>
    %c128_i32 = arith.constant 128 : i32
    %16 = arith.muli %arg1, %c128_i32 : i32
    %17 = vector.broadcast %16 : i32 to vector<128x1xi32>
    %18 = arith.addi %15, %17 : vector<128x1xi32>
    %c256_i32 = arith.constant 256 : i32
    %19 = vector.broadcast %c256_i32 : i32 to vector<128x1xi32>
    %20 = arith.cmpi slt, %18, %19 : vector<128x1xi32>
    %c0_8 = arith.constant 0 : index
    %c0_9 = arith.constant 0 : index
    %21 = vector.load %arg5[%c0_8, %c0_9] : memref<128x128xbf16, #tpu.memory_space<vmem>>, vector<128x128xbf16>
    %cst_10 = arith.constant dense<0.000000e+00> : vector<128x128xf32>
    %22 = tpu.matmul %13, %21, %cst_10 {dimension_numbers = #tpu.dot_dimension_numbers<[1], [0], [0], [1], [0, 0, 1, 1], [], []>} : vector<128x128xbf16>, vector<128x128xbf16>, vector<128x128xf32> -> vector<128x128xf32>
    %c0_11 = arith.constant 0 : index
    %c0_12 = arith.constant 0 : index
    %23 = vector.load %arg6[%c0_11, %c0_12] : memref<1x128xf32, #tpu.memory_space<vmem>>, vector<1x128xf32>
    %24 = vector.broadcast %23 : vector<1x128xf32> to vector<128x128xf32>
    %25 = arith.addf %22, %24 : vector<128x128xf32>
    %cst_13 = arith.constant 0.000000e+00 : f32
    %26 = vector.broadcast %cst_13 : f32 to vector<128x128xf32>
    %27 = arith.maximumf %25, %26 : vector<128x128xf32>
    %28 = arith.truncf %27 : vector<128x128xf32> to vector<128x128xbf16>
    %c0_14 = arith.constant 0 : index
    %c0_15 = arith.constant 0 : index
    %29 = vector.load %arg7[%c0_14, %c0_15] : memref<128x128xbf16, #tpu.memory_space<vmem>>, vector<128x128xbf16>
    %cst_16 = arith.constant dense<0.000000e+00> : vector<128x128xf32>
    %30 = tpu.matmul %28, %29, %cst_16 {dimension_numbers = #tpu.dot_dimension_numbers<[1], [0], [0], [1], [0, 0, 1, 1], [], []>} : vector<128x128xbf16>, vector<128x128xbf16>, vector<128x128xf32> -> vector<128x128xf32>
    %c0_17 = arith.constant 0 : index
    %c0_18 = arith.constant 0 : index
    %31 = vector.load %arg8[%c0_17, %c0_18] : memref<1x128xf32, #tpu.memory_space<vmem>>, vector<1x128xf32>
    %32 = vector.broadcast %31 : vector<1x128xf32> to vector<128x128xf32>
    %33 = arith.addf %30, %32 : vector<128x128xf32>
    %c0_19 = arith.constant 0 : index
    %c0_20 = arith.constant 0 : index
    %c0_21 = arith.constant 0 : index
    %34 = vector.load %arg17[%c0_19, %c0_20, %c0_21] : memref<1x1x128xf32, #tpu.memory_space<vmem>>, vector<1x1x128xf32>
    %35 = vector.shape_cast %34 : vector<1x1x128xf32> to vector<1x128xf32>
    %cst_22 = arith.constant 0xFF800000 : f32
    %36 = vector.shape_cast %20 : vector<128x1xi1> to vector<128x1xi1>
    %37 = vector.broadcast %36 : vector<128x1xi1> to vector<128x128xi1>
    %38 = vector.broadcast %cst_22 : f32 to vector<128x128xf32>
    %39 = arith.select %37, %33, %38 : vector<128x128xi1>, vector<128x128xf32>
    %cst_23 = arith.constant dense<0xFF800000> : vector<128xf32>
    %40 = vector.multi_reduction <maximumf>, %39, %cst_23 [0] : vector<128x128xf32> to vector<128xf32>
    %41 = vector.shape_cast %40 : vector<128xf32> to vector<1x128xf32>
    %42 = arith.maximumf %35, %41 : vector<1x128xf32>
    %c0_24 = arith.constant 0 : index
    %c0_25 = arith.constant 0 : index
    %c0_26 = arith.constant 0 : index
    %43 = vector.load %arg17[%c0_24, %c0_25, %c0_26] : memref<1x1x128xf32, #tpu.memory_space<vmem>>, vector<1x1x128xf32>
    %44 = vector.shape_cast %43 : vector<1x1x128xf32> to vector<1x128xf32>
    %45 = vector.shape_cast %42 : vector<1x128xf32> to vector<1x1x128xf32>
    tpu.vector_store %arg17[%c0_24, %c0_25, %c0_26], %45 {strides = array<i32>} : memref<1x1x128xf32, #tpu.memory_space<vmem>>, vector<1x1x128xf32>,
    %c0_27 = arith.constant 0 : index
    %c0_28 = arith.constant 0 : index
    %46 = vector.load %arg9[%c0_27, %c0_28] : memref<128x128xbf16, #tpu.memory_space<vmem>>, vector<128x128xbf16>
    %cst_29 = arith.constant dense<0.000000e+00> : vector<128x128xf32>
    %47 = tpu.matmul %14, %46, %cst_29 {dimension_numbers = #tpu.dot_dimension_numbers<[1], [0], [0], [1], [0, 0, 1, 1], [], []>} : vector<128x128xbf16>, vector<128x128xbf16>, vector<128x128xf32> -> vector<128x128xf32>
    %c0_30 = arith.constant 0 : index
    %c0_31 = arith.constant 0 : index
    %48 = vector.load %arg10[%c0_30, %c0_31] : memref<1x128xf32, #tpu.memory_space<vmem>>, vector<1x128xf32>
    %49 = vector.broadcast %48 : vector<1x128xf32> to vector<128x128xf32>
    %50 = arith.addf %47, %49 : vector<128x128xf32>
    %cst_32 = arith.constant 0.000000e+00 : f32
    %51 = vector.broadcast %cst_32 : f32 to vector<128x128xf32>
    %52 = arith.maximumf %50, %51 : vector<128x128xf32>
    %53 = arith.truncf %52 : vector<128x128xf32> to vector<128x128xbf16>
    %c0_33 = arith.constant 0 : index
    %c0_34 = arith.constant 0 : index
    %54 = vector.load %arg11[%c0_33, %c0_34] : memref<128x128xbf16, #tpu.memory_space<vmem>>, vector<128x128xbf16>
    %cst_35 = arith.constant dense<0.000000e+00> : vector<128x128xf32>
    %55 = tpu.matmul %53, %54, %cst_35 {dimension_numbers = #tpu.dot_dimension_numbers<[1], [0], [0], [1], [0, 0, 1, 1], [], []>} : vector<128x128xbf16>, vector<128x128xbf16>, vector<128x128xf32> -> vector<128x128xf32>
    %c0_36 = arith.constant 0 : index
    %c0_37 = arith.constant 0 : index
    %56 = vector.load %arg12[%c0_36, %c0_37] : memref<1x128xf32, #tpu.memory_space<vmem>>, vector<1x128xf32>
    %57 = vector.broadcast %56 : vector<1x128xf32> to vector<128x128xf32>
    %58 = arith.addf %55, %57 : vector<128x128xf32>
    %cst_38 = arith.constant 0.000000e+00 : f32
    %59 = vector.broadcast %cst_38 : f32 to vector<128x128xf32>
    %60 = arith.maximumf %58, %59 : vector<128x128xf32>
    %c0_39 = arith.constant 0 : index
    %c0_40 = arith.constant 0 : index
    %61 = vector.load %arg19[%c0_39, %c0_40] : memref<1x128xf32, #tpu.memory_space<vmem>>, vector<1x128xf32>
    %cst_41 = arith.constant 0xFF800000 : f32
    %62 = vector.shape_cast %20 : vector<128x1xi1> to vector<128x1xi1>
    %63 = vector.broadcast %62 : vector<128x1xi1> to vector<128x128xi1>
    %64 = vector.broadcast %cst_41 : f32 to vector<128x128xf32>
    %65 = arith.select %63, %60, %64 : vector<128x128xi1>, vector<128x128xf32>
    %cst_42 = arith.constant dense<0xFF800000> : vector<128xf32>
    %66 = vector.multi_reduction <maximumf>, %65, %cst_42 [0] : vector<128x128xf32> to vector<128xf32>
    %67 = vector.shape_cast %66 : vector<128xf32> to vector<1x128xf32>
    %68 = arith.maximumf %61, %67 : vector<1x128xf32>
    %c0_43 = arith.constant 0 : index
    %c0_44 = arith.constant 0 : index
    %69 = vector.load %arg19[%c0_43, %c0_44] : memref<1x128xf32, #tpu.memory_space<vmem>>, vector<1x128xf32>
    tpu.vector_store %arg19[%c0_43, %c0_44], %68 {strides = array<i32>} : memref<1x128xf32, #tpu.memory_space<vmem>>, vector<1x128xf32>,
    %c1_i32 = arith.constant 1 : i32
    %70 = arith.cmpi eq, %arg1, %c1_i32 : i32
    %71 = arith.extui %70 : i1 to i32
    %c0_i32_45 = arith.constant 0 : i32
    %72 = arith.cmpi ne, %71, %c0_i32_45 : i32
    scf.if %72 {
      %c0_46 = arith.constant 0 : index
      %c0_47 = arith.constant 0 : index
      %73 = vector.load %arg19[%c0_46, %c0_47] : memref<1x128xf32, #tpu.memory_space<vmem>>, vector<1x128xf32>
      %74 = arith.truncf %73 : vector<1x128xf32> to vector<1x128xbf16>
      %c0_48 = arith.constant 0 : index
      %c0_49 = arith.constant 0 : index
      %75 = vector.load %arg13[%c0_48, %c0_49] : memref<128x64xbf16, #tpu.memory_space<vmem>>, vector<128x64xbf16>
      %cst_50 = arith.constant dense<0.000000e+00> : vector<1x64xf32>
      %76 = tpu.matmul %74, %75, %cst_50 {dimension_numbers = #tpu.dot_dimension_numbers<[1], [0], [0], [1], [0, 0, 1, 1], [], []>} : vector<1x128xbf16>, vector<128x64xbf16>, vector<1x64xf32> -> vector<1x64xf32>
      %c0_51 = arith.constant 0 : index
      %c0_52 = arith.constant 0 : index
      %77 = vector.load %arg14[%c0_51, %c0_52] : memref<1x64xf32, #tpu.memory_space<vmem>>, vector<1x64xf32>
      %78 = arith.addf %76, %77 : vector<1x64xf32>
      %cst_53 = arith.constant 0.000000e+00 : f32
      %79 = vector.broadcast %cst_53 : f32 to vector<1x64xf32>
      %80 = arith.maximumf %78, %79 : vector<1x64xf32>
      %81 = arith.truncf %80 : vector<1x64xf32> to vector<1x64xbf16>
      %c0_54 = arith.constant 0 : index
      %c0_55 = arith.constant 0 : index
      %82 = vector.load %arg15[%c0_54, %c0_55] : memref<64x128xbf16, #tpu.memory_space<vmem>>, vector<64x128xbf16>
      %cst_56 = arith.constant dense<0.000000e+00> : vector<1x128xf32>
      %83 = tpu.matmul %81, %82, %cst_56 {dimension_numbers = #tpu.dot_dimension_numbers<[1], [0], [0], [1], [0, 0, 1, 1], [], []>} : vector<1x64xbf16>, vector<64x128xbf16>, vector<1x128xf32> -> vector<1x128xf32>
      %c0_57 = arith.constant 0 : index
      %c0_58 = arith.constant 0 : index
      %84 = vector.load %arg16[%c0_57, %c0_58] : memref<1x128xf32, #tpu.memory_space<vmem>>, vector<1x128xf32>
      %85 = arith.addf %83, %84 : vector<1x128xf32>
      %c0_59 = arith.constant 0 : index
      %c0_60 = arith.constant 0 : index
      %c0_61 = arith.constant 0 : index
      %86 = vector.load %arg18[%c0_59, %c0_60, %c0_61] : memref<1x1x128xf32, #tpu.memory_space<vmem>>, vector<1x1x128xf32>
      %87 = vector.shape_cast %86 : vector<1x1x128xf32> to vector<1x128xf32>
      %88 = vector.shape_cast %85 : vector<1x128xf32> to vector<1x1x128xf32>
      tpu.vector_store %arg18[%c0_59, %c0_60, %c0_61], %88 {strides = array<i32>} : memref<1x1x128xf32, #tpu.memory_space<vmem>>, vector<1x1x128xf32>,
    } else {
    }
    return
  }
  func.func @transform_0(%arg0: i32, %arg1: i32) -> (i32, i32, i32) {
    %c0_i32 = arith.constant 0 : i32
    %c0_i32_0 = arith.constant 0 : i32
    return %arg0, %arg1, %c0_i32 : i32, i32, i32
  }
  func.func @transform_1(%arg0: i32, %arg1: i32) -> (i32, i32) {
    %c0_i32 = arith.constant 0 : i32
    %c0_i32_0 = arith.constant 0 : i32
    %c0_i32_1 = arith.constant 0 : i32
    return %c0_i32, %c0_i32_0 : i32, i32
  }
  func.func @transform_2(%arg0: i32, %arg1: i32) -> (i32, i32) {
    %c0_i32 = arith.constant 0 : i32
    %c0_i32_0 = arith.constant 0 : i32
    %c0_i32_1 = arith.constant 0 : i32
    return %c0_i32, %c0_i32_0 : i32, i32
  }
  func.func @transform_3(%arg0: i32, %arg1: i32) -> (i32, i32) {
    %c0_i32 = arith.constant 0 : i32
    %c0_i32_0 = arith.constant 0 : i32
    %c0_i32_1 = arith.constant 0 : i32
    return %c0_i32, %c0_i32_0 : i32, i32
  }
  func.func @transform_4(%arg0: i32, %arg1: i32) -> (i32, i32) {
    %c0_i32 = arith.constant 0 : i32
    %c0_i32_0 = arith.constant 0 : i32
    %c0_i32_1 = arith.constant 0 : i32
    return %c0_i32, %c0_i32_0 : i32, i32
  }
  func.func @transform_5(%arg0: i32, %arg1: i32) -> (i32, i32) {
    %c0_i32 = arith.constant 0 : i32
    %c0_i32_0 = arith.constant 0 : i32
    %c0_i32_1 = arith.constant 0 : i32
    return %c0_i32, %c0_i32_0 : i32, i32
  }
  func.func @transform_6(%arg0: i32, %arg1: i32) -> (i32, i32) {
    %c0_i32 = arith.constant 0 : i32
    %c0_i32_0 = arith.constant 0 : i32
    %c0_i32_1 = arith.constant 0 : i32
    return %c0_i32, %c0_i32_0 : i32, i32
  }
  func.func @transform_7(%arg0: i32, %arg1: i32) -> (i32, i32) {
    %c0_i32 = arith.constant 0 : i32
    %c0_i32_0 = arith.constant 0 : i32
    %c0_i32_1 = arith.constant 0 : i32
    return %c0_i32, %c0_i32_0 : i32, i32
  }
  func.func @transform_8(%arg0: i32, %arg1: i32) -> (i32, i32) {
    %c0_i32 = arith.constant 0 : i32
    %c0_i32_0 = arith.constant 0 : i32
    %c0_i32_1 = arith.constant 0 : i32
    return %c0_i32, %c0_i32_0 : i32, i32
  }
  func.func @transform_9(%arg0: i32, %arg1: i32) -> (i32, i32) {
    %c0_i32 = arith.constant 0 : i32
    %c0_i32_0 = arith.constant 0 : i32
    %c0_i32_1 = arith.constant 0 : i32
    return %c0_i32, %c0_i32_0 : i32, i32
  }
  func.func @transform_10(%arg0: i32, %arg1: i32) -> (i32, i32) {
    %c0_i32 = arith.constant 0 : i32
    %c0_i32_0 = arith.constant 0 : i32
    %c0_i32_1 = arith.constant 0 : i32
    return %c0_i32, %c0_i32_0 : i32, i32
  }
  func.func @transform_11(%arg0: i32, %arg1: i32) -> (i32, i32) {
    %c0_i32 = arith.constant 0 : i32
    %c0_i32_0 = arith.constant 0 : i32
    %c0_i32_1 = arith.constant 0 : i32
    return %c0_i32, %c0_i32_0 : i32, i32
  }
  func.func @transform_12(%arg0: i32, %arg1: i32) -> (i32, i32) {
    %c0_i32 = arith.constant 0 : i32
    %c0_i32_0 = arith.constant 0 : i32
    %c0_i32_1 = arith.constant 0 : i32
    return %c0_i32, %c0_i32_0 : i32, i32
  }
  func.func @transform_13(%arg0: i32, %arg1: i32) -> (i32, i32) {
    %c0_i32 = arith.constant 0 : i32
    %c0_i32_0 = arith.constant 0 : i32
    %c0_i32_1 = arith.constant 0 : i32
    return %c0_i32, %c0_i32_0 : i32, i32
  }
  func.func @transform_14(%arg0: i32, %arg1: i32) -> (i32, i32) {
    %c0_i32 = arith.constant 0 : i32
    %c0_i32_0 = arith.constant 0 : i32
    %c0_i32_1 = arith.constant 0 : i32
    return %c0_i32, %c0_i32_0 : i32, i32
  }
  func.func @transform_15(%arg0: i32, %arg1: i32) -> (i32, i32, i32) {
    %c0_i32 = arith.constant 0 : i32
    %c0_i32_0 = arith.constant 0 : i32
    %c0_i32_1 = arith.constant 0 : i32
    return %arg0, %c0_i32, %c0_i32_0 : i32, i32, i32
  }
  func.func @transform_16(%arg0: i32, %arg1: i32) -> (i32, i32, i32) {
    %c0_i32 = arith.constant 0 : i32
    %c0_i32_0 = arith.constant 0 : i32
    %c0_i32_1 = arith.constant 0 : i32
    return %arg0, %c0_i32, %c0_i32_0 : i32, i32, i32
  }
}

</mosaic_0001>

<llo_original>
// kernel: tpu_custom_call.1
$region0: #{tpu_custom_call.1}
  #allocation0 [shape = 'u32[]', space=smem, size = 0x4, offset = 0x4, fixed_abs, tag = 'smem constant byte address 0x4 - core index']
  #allocation1 [shape = 'u32[72,128]{1,0:T(1,128)}', space=vmem, size = 0x9000, scoped, tag = 'internal scratch']
  #allocation2 [shape = 'f32[1,128]{1,0:T(1,128)}', space=vmem, size = 0x200, scoped, tag = 'scratch operand']
  %s0 = inlined_call_operand.vmem [shape: bf16[2,256,16], index: 0, kind: input, shape index: {}]
  %s1 = inlined_call_operand.vmem [shape: bf16[16,256], index: 1, kind: input, shape index: {}]
  %s2 = inlined_call_operand.vmem [shape: f32[1,256], index: 2, kind: input, shape index: {}]
  %s3 = inlined_call_operand.vmem [shape: bf16[128,128], index: 3, kind: input, shape index: {}]
  %s4 = inlined_call_operand.vmem [shape: f32[1,128], index: 4, kind: input, shape index: {}]
  %s5 = inlined_call_operand.vmem [shape: bf16[128,128], index: 5, kind: input, shape index: {}]
  %s6 = inlined_call_operand.vmem [shape: f32[1,128], index: 6, kind: input, shape index: {}]
  %s7 = inlined_call_operand.vmem [shape: bf16[128,128], index: 7, kind: input, shape index: {}]
  %s8 = inlined_call_operand.vmem [shape: f32[1,128], index: 8, kind: input, shape index: {}]
  %s9 = inlined_call_operand.vmem [shape: bf16[128,128], index: 9, kind: input, shape index: {}]
  %s10 = inlined_call_operand.vmem [shape: f32[1,128], index: 10, kind: input, shape index: {}]
  %s11 = inlined_call_operand.vmem [shape: bf16[128,64], index: 11, kind: input, shape index: {}]
  %s12 = inlined_call_operand.vmem [shape: f32[1,64], index: 12, kind: input, shape index: {}]
  %s13 = inlined_call_operand.vmem [shape: bf16[64,128], index: 13, kind: input, shape index: {}]
  %s14 = inlined_call_operand.vmem [shape: f32[1,128], index: 14, kind: input, shape index: {}]
  %s15 = inlined_call_operand.hbm [shape: f32[2,1,128], index: 15, kind: output, shape index: {0}]
  %s16 = inlined_call_operand.hbm [shape: f32[2,1,128], index: 16, kind: output, shape index: {1}]
  %17 = xla_tuple %s15, %s16
  %s18 = sld [smem:[#allocation0]]
  $region109: #{tpu_custom_call.1} parent=0
    _
  %s20 = ssub.s32 1, %s18
  %s21 = scalar_select 0, %s20, %s18
  $region1: #{tpu_custom_call.1} parent=0
    #allocation3 [shape = 'u8[1024]{0}', space=vmem, size = 0x400, scoped, tag = 'output window, operand 0']
    #allocation4 [shape = 's32[2]{0}', space=sflag, size = 0x8, scoped, tag = 'scoped memory for tpu_custom_call.1']
    #allocation5 [shape = 'u8[1024]{0}', space=vmem, size = 0x400, scoped, tag = 'output window, operand 1']
    #allocation6 [shape = 's32[2]{0}', space=sflag, size = 0x8, scoped, tag = 'scoped memory for tpu_custom_call.1']
    %22 = vsyncpa [#allocation4], 0
    %s23 = scalar_lea.sflag [#allocation4], 1
    %24 = vsyncpa %s23, 0
    %25 = vsyncpa [#allocation6], 0
    %s26 = scalar_lea.sflag [#allocation6], 1
    %27 = vsyncpa %s26, 0
    loop: start=0, step=1, limit=6
    $region2: #{tpu_custom_call.1} parent=1 // loop_pre_header
      _
    $region3: #{tpu_custom_call.1} parent=1 // loop_header
      %s29 = sphi 0, %s33
      %p30 = scmp.ge.s32.totalorder %s29, 6
      %s36 = sphi 0, %s48
      %s37 = sphi 0, %s44
      %s38 = sphi 0, %s36
      %s39 = sphi 0, %s37
      %s40 = sphi 0, %s38
      %s41 = sphi 0, %s39
      %s53 = sphi 0, %s55
      %s56 = sphi 0, %s53
      %s57 = sphi 0, %s56
      %s73 = sphi 0, %s57
      %s77 = sphi 0, %s77
      %s79 = sphi 0, %s77
      %s80 = sphi 0, %s79
      %s94 = sphi 0, %s80
      %s98 = sphi 0, %s98
      %s100 = sphi 0, %s98
      %s101 = sphi 0, %s100
      %s115 = sphi 0, %s101
      %s119 = sphi 0, %s119
      %s121 = sphi 0, %s119
      %s122 = sphi 0, %s121
      %s136 = sphi 0, %s122
      %s140 = sphi 0, %s140
      %s142 = sphi 0, %s140
      %s143 = sphi 0, %s142
      %s157 = sphi 0, %s143
      %s161 = sphi 0, %s161
      %s163 = sphi 0, %s161
      %s164 = sphi 0, %s163
      %s178 = sphi 0, %s164
      %s182 = sphi 0, %s182
      %s184 = sphi 0, %s182
      %s185 = sphi 0, %s184
      %s199 = sphi 0, %s185
      %s203 = sphi 0, %s203
      %s205 = sphi 0, %s203
      %s206 = sphi 0, %s205
      %s220 = sphi 0, %s206
      %s224 = sphi 0, %s224
      %s226 = sphi 0, %s224
      %s227 = sphi 0, %s226
      %s241 = sphi 0, %s227
      %s245 = sphi 0, %s245
      %s247 = sphi 0, %s245
      %s248 = sphi 0, %s247
      %s262 = sphi 0, %s248
      %s266 = sphi 0, %s266
      %s268 = sphi 0, %s266
      %s269 = sphi 0, %s268
      %s283 = sphi 0, %s269
      %s287 = sphi 0, %s287
      %s289 = sphi 0, %s287
      %s290 = sphi 0, %s289
      %s304 = sphi 0, %s290
      %s308 = sphi 0, %s308
      %s310 = sphi 0, %s308
      %s311 = sphi 0, %s310
      %s325 = sphi 0, %s311
      %s329 = sphi 0, %s329
      %s331 = sphi 0, %s329
      %s332 = sphi 0, %s331
      %s346 = sphi 0, %s332
      %s350 = sphi 0, %s350
      %s352 = sphi 0, %s350
      %s353 = sphi 0, %s352
      %s367 = sphi 0, %s353
      %s373 = sphi 0, %s375
      %s376 = sphi 0, %s373
      %s377 = sphi 0, %s376
      %s393 = sphi 0, %s377
      %s399 = sphi 0, %s401
      %s402 = sphi 0, %s399
      %s403 = sphi 0, %s402
      %s419 = sphi 0, %s403
    $region4: #{tpu_custom_call.1} parent=1 // loop_header_branch
      %32 = sbr.rel (%p30) target = $region8
    $region5: #{tpu_custom_call.1} parent=1 // loop_body
      %s34 = ssub.s32 %s29, 1
      %s35 = ssub.s32 %s29, 2
      %s42 = sadd.s32 1, %s37
      %p43 = scmp.ge.s32.totalorder %s42, 2
      %s44 = scalar_select %p43, 0, %s42
      %s45 = sadd.s32 1, %s36
      %s46 = scalar_select %p43, %s45, %s36
      %p47 = scmp.ge.s32.totalorder %s46, 2
      %s48 = scalar_select %p47, 0, %s46
      %s49 = ssub.s32 %s36, %s48
      %s50 = ssub.s32 %s37, %s44
      %s51 = sor.u32 %s49, %s50
      %p52 = scmp.eq.s32.totalorder %s51, 0
      %s54 = sadd.s32 %s53, 1
      %s55 = scalar_select %p52, %s53, %s54
      %p58 = pneg %p52
      %p59 = scmp.eq.s32.totalorder %s29, 3
      %p60 = por %p58, %p59
      %p61 = scmp.ne.s32.totalorder %s53, %s56
      %p62 = scmp.eq.s32.totalorder %s29, 0
      %p63 = por %p61, %p62
      %p64 = scmp.ne.s32.totalorder %s53, %s56
      %p65 = scmp.eq.s32.totalorder %s34, 3
      %p66 = por %p64, %p65
      %p67 = scmp.ne.s32.totalorder %s56, %s57
      %p68 = scmp.eq.s32.totalorder %s34, 0
      %p69 = por %p67, %p68
      %p70 = scmp.ne.s32.totalorder %s56, %s57
      %p71 = scmp.eq.s32.totalorder %s35, 3
      %p72 = por %p70, %p71
      %p74 = scmp.ne.s32.totalorder %s57, %s73
      %p75 = scmp.eq.s32.totalorder %s35, 0
      %p76 = por %p74, %p75
      %s78 = sadd.s32 %s77, 1
      %p81 = scmp.eq.s32.totalorder %s29, 3
      %p82 = scmp.ne.s32.totalorder %s77, %s79
      %p83 = scmp.eq.s32.totalorder %s29, 0
      %p84 = por %p82, %p83
      %p85 = scmp.ne.s32.totalorder %s77, %s79
      %p86 = scmp.eq.s32.totalorder %s34, 3
      %p87 = por %p85, %p86
      %p88 = scmp.ne.s32.totalorder %s79, %s80
      %p89 = scmp.eq.s32.totalorder %s34, 0
      %p90 = por %p88, %p89
      %p91 = scmp.ne.s32.totalorder %s79, %s80
      %p92 = scmp.eq.s32.totalorder %s35, 3
      %p93 = por %p91, %p92
      %p95 = scmp.ne.s32.totalorder %s80, %s94
      %p96 = scmp.eq.s32.totalorder %s35, 0
      %p97 = por %p95, %p96
      %s99 = sadd.s32 %s98, 1
      %p102 = scmp.eq.s32.totalorder %s29, 3
      %p103 = scmp.ne.s32.totalorder %s98, %s100
      %p104 = scmp.eq.s32.totalorder %s29, 0
      %p105 = por %p103, %p104
      %p106 = scmp.ne.s32.totalorder %s98, %s100
      %p107 = scmp.eq.s32.totalorder %s34, 3
      %p108 = por %p106, %p107
      %p109 = scmp.ne.s32.totalorder %s100, %s101
      %p110 = scmp.eq.s32.totalorder %s34, 0
      %p111 = por %p109, %p110
      %p112 = scmp.ne.s32.totalorder %s100, %s101
      %p113 = scmp.eq.s32.totalorder %s35, 3
      %p114 = por %p112, %p113
      %p116 = scmp.ne.s32.totalorder %s101, %s115
      %p117 = scmp.eq.s32.totalorder %s35, 0
      %p118 = por %p116, %p117
      %s120 = sadd.s32 %s119, 1
      %p123 = scmp.eq.s32.totalorder %s29, 3
      %p124 = scmp.ne.s32.totalorder %s119, %s121
      %p125 = scmp.eq.s32.totalorder %s29, 0
      %p126 = por %p124, %p125
      %p127 = scmp.ne.s32.totalorder %s119, %s121
      %p128 = scmp.eq.s32.totalorder %s34, 3
      %p129 = por %p127, %p128
      %p130 = scmp.ne.s32.totalorder %s121, %s122
      %p131 = scmp.eq.s32.totalorder %s34, 0
      %p132 = por %p130, %p131
      %p133 = scmp.ne.s32.totalorder %s121, %s122
      %p134 = scmp.eq.s32.totalorder %s35, 3
      %p135 = por %p133, %p134
      %p137 = scmp.ne.s32.totalorder %s122, %s136
      %p138 = scmp.eq.s32.totalorder %s35, 0
      %p139 = por %p137, %p138
      %s141 = sadd.s32 %s140, 1
      %p144 = scmp.eq.s32.totalorder %s29, 3
      %p145 = scmp.ne.s32.totalorder %s140, %s142
      %p146 = scmp.eq.s32.totalorder %s29, 0
      %p147 = por %p145, %p146
      %p148 = scmp.ne.s32.totalorder %s140, %s142
      %p149 = scmp.eq.s32.totalorder %s34, 3
      %p150 = por %p148, %p149
      %p151 = scmp.ne.s32.totalorder %s142, %s143
      %p152 = scmp.eq.s32.totalorder %s34, 0
      %p153 = por %p151, %p152
      %p154 = scmp.ne.s32.totalorder %s142, %s143
      %p155 = scmp.eq.s32.totalorder %s35, 3
      %p156 = por %p154, %p155
      %p158 = scmp.ne.s32.totalorder %s143, %s157
      %p159 = scmp.eq.s32.totalorder %s35, 0
      %p160 = por %p158, %p159
      %s162 = sadd.s32 %s161, 1
      %p165 = scmp.eq.s32.totalorder %s29, 3
      %p166 = scmp.ne.s32.totalorder %s161, %s163
      %p167 = scmp.eq.s32.totalorder %s29, 0
      %p168 = por %p166, %p167
      %p169 = scmp.ne.s32.totalorder %s161, %s163
      %p170 = scmp.eq.s32.totalorder %s34, 3
      %p171 = por %p169, %p170
      %p172 = scmp.ne.s32.totalorder %s163, %s164
      %p173 = scmp.eq.s32.totalorder %s34, 0
      %p174 = por %p172, %p173
      %p175 = scmp.ne.s32.totalorder %s163, %s164
      %p176 = scmp.eq.s32.totalorder %s35, 3
      %p177 = por %p175, %p176
      %p179 = scmp.ne.s32.totalorder %s164, %s178
      %p180 = scmp.eq.s32.totalorder %s35, 0
      %p181 = por %p179, %p180
      %s183 = sadd.s32 %s182, 1
      %p186 = scmp.eq.s32.totalorder %s29, 3
      %p187 = scmp.ne.s32.totalorder %s182, %s184
      %p188 = scmp.eq.s32.totalorder %s29, 0
      %p189 = por %p187, %p188
      %p190 = scmp.ne.s32.totalorder %s182, %s184
      %p191 = scmp.eq.s32.totalorder %s34, 3
      %p192 = por %p190, %p191
      %p193 = scmp.ne.s32.totalorder %s184, %s185
      %p194 = scmp.eq.s32.totalorder %s34, 0
      %p195 = por %p193, %p194
      %p196 = scmp.ne.s32.totalorder %s184, %s185
      %p197 = scmp.eq.s32.totalorder %s35, 3
      %p198 = por %p196, %p197
      %p200 = scmp.ne.s32.totalorder %s185, %s199
      %p201 = scmp.eq.s32.totalorder %s35, 0
      %p202 = por %p200, %p201
      %s204 = sadd.s32 %s203, 1
      %p207 = scmp.eq.s32.totalorder %s29, 3
      %p208 = scmp.ne.s32.totalorder %s203, %s205
      %p209 = scmp.eq.s32.totalorder %s29, 0
      %p210 = por %p208, %p209
      %p211 = scmp.ne.s32.totalorder %s203, %s205
      %p212 = scmp.eq.s32.totalorder %s34, 3
      %p213 = por %p211, %p212
      %p214 = scmp.ne.s32.totalorder %s205, %s206
      %p215 = scmp.eq.s32.totalorder %s34, 0
      %p216 = por %p214, %p215
      %p217 = scmp.ne.s32.totalorder %s205, %s206
      %p218 = scmp.eq.s32.totalorder %s35, 3
      %p219 = por %p217, %p218
      %p221 = scmp.ne.s32.totalorder %s206, %s220
      %p222 = scmp.eq.s32.totalorder %s35, 0
      %p223 = por %p221, %p222
      %s225 = sadd.s32 %s224, 1
      %p228 = scmp.eq.s32.totalorder %s29, 3
      %p229 = scmp.ne.s32.totalorder %s224, %s226
      %p230 = scmp.eq.s32.totalorder %s29, 0
      %p231 = por %p229, %p230
      %p232 = scmp.ne.s32.totalorder %s224, %s226
      %p233 = scmp.eq.s32.totalorder %s34, 3
      %p234 = por %p232, %p233
      %p235 = scmp.ne.s32.totalorder %s226, %s227
      %p236 = scmp.eq.s32.totalorder %s34, 0
      %p237 = por %p235, %p236
      %p238 = scmp.ne.s32.totalorder %s226, %s227
      %p239 = scmp.eq.s32.totalorder %s35, 3
      %p240 = por %p238, %p239
      %p242 = scmp.ne.s32.totalorder %s227, %s241
      %p243 = scmp.eq.s32.totalorder %s35, 0
      %p244 = por %p242, %p243
      %s246 = sadd.s32 %s245, 1
      %p249 = scmp.eq.s32.totalorder %s29, 3
      %p250 = scmp.ne.s32.totalorder %s245, %s247
      %p251 = scmp.eq.s32.totalorder %s29, 0
      %p252 = por %p250, %p251
      %p253 = scmp.ne.s32.totalorder %s245, %s247
      %p254 = scmp.eq.s32.totalorder %s34, 3
      %p255 = por %p253, %p254
      %p256 = scmp.ne.s32.totalorder %s247, %s248
      %p257 = scmp.eq.s32.totalorder %s34, 0
      %p258 = por %p256, %p257
      %p259 = scmp.ne.s32.totalorder %s247, %s248
      %p260 = scmp.eq.s32.totalorder %s35, 3
      %p261 = por %p259, %p260
      %p263 = scmp.ne.s32.totalorder %s248, %s262
      %p264 = scmp.eq.s32.totalorder %s35, 0
      %p265 = por %p263, %p264
      %s267 = sadd.s32 %s266, 1
      %p270 = scmp.eq.s32.totalorder %s29, 3
      %p271 = scmp.ne.s32.totalorder %s266, %s268
      %p272 = scmp.eq.s32.totalorder %s29, 0
      %p273 = por %p271, %p272
      %p274 = scmp.ne.s32.totalorder %s266, %s268
      %p275 = scmp.eq.s32.totalorder %s34, 3
      %p276 = por %p274, %p275
      %p277 = scmp.ne.s32.totalorder %s268, %s269
      %p278 = scmp.eq.s32.totalorder %s34, 0
      %p279 = por %p277, %p278
      %p280 = scmp.ne.s32.totalorder %s268, %s269
      %p281 = scmp.eq.s32.totalorder %s35, 3
      %p282 = por %p280, %p281
      %p284 = scmp.ne.s32.totalorder %s269, %s283
      %p285 = scmp.eq.s32.totalorder %s35, 0
      %p286 = por %p284, %p285
      %s288 = sadd.s32 %s287, 1
      %p291 = scmp.eq.s32.totalorder %s29, 3
      %p292 = scmp.ne.s32.totalorder %s287, %s289
      %p293 = scmp.eq.s32.totalorder %s29, 0
      %p294 = por %p292, %p293
      %p295 = scmp.ne.s32.totalorder %s287, %s289
      %p296 = scmp.eq.s32.totalorder %s34, 3
      %p297 = por %p295, %p296
      %p298 = scmp.ne.s32.totalorder %s289, %s290
      %p299 = scmp.eq.s32.totalorder %s34, 0
      %p300 = por %p298, %p299
      %p301 = scmp.ne.s32.totalorder %s289, %s290
      %p302 = scmp.eq.s32.totalorder %s35, 3
      %p303 = por %p301, %p302
      %p305 = scmp.ne.s32.totalorder %s290, %s304
      %p306 = scmp.eq.s32.totalorder %s35, 0
      %p307 = por %p305, %p306
      %s309 = sadd.s32 %s308, 1
      %p312 = scmp.eq.s32.totalorder %s29, 3
      %p313 = scmp.ne.s32.totalorder %s308, %s310
      %p314 = scmp.eq.s32.totalorder %s29, 0
      %p315 = por %p313, %p314
      %p316 = scmp.ne.s32.totalorder %s308, %s310
      %p317 = scmp.eq.s32.totalorder %s34, 3
      %p318 = por %p316, %p317
      %p319 = scmp.ne.s32.totalorder %s310, %s311
      %p320 = scmp.eq.s32.totalorder %s34, 0
      %p321 = por %p319, %p320
      %p322 = scmp.ne.s32.totalorder %s310, %s311
      %p323 = scmp.eq.s32.totalorder %s35, 3
      %p324 = por %p322, %p323
      %p326 = scmp.ne.s32.totalorder %s311, %s325
      %p327 = scmp.eq.s32.totalorder %s35, 0
      %p328 = por %p326, %p327
      %s330 = sadd.s32 %s329, 1
      %p333 = scmp.eq.s32.totalorder %s29, 3
      %p334 = scmp.ne.s32.totalorder %s329, %s331
      %p335 = scmp.eq.s32.totalorder %s29, 0
      %p336 = por %p334, %p335
      %p337 = scmp.ne.s32.totalorder %s329, %s331
      %p338 = scmp.eq.s32.totalorder %s34, 3
      %p339 = por %p337, %p338
      %p340 = scmp.ne.s32.totalorder %s331, %s332
      %p341 = scmp.eq.s32.totalorder %s34, 0
      %p342 = por %p340, %p341
      %p343 = scmp.ne.s32.totalorder %s331, %s332
      %p344 = scmp.eq.s32.totalorder %s35, 3
      %p345 = por %p343, %p344
      %p347 = scmp.ne.s32.totalorder %s332, %s346
      %p348 = scmp.eq.s32.totalorder %s35, 0
      %p349 = por %p347, %p348
      %s351 = sadd.s32 %s350, 1
      %p354 = scmp.eq.s32.totalorder %s29, 3
      %p355 = scmp.ne.s32.totalorder %s350, %s352
      %p356 = scmp.eq.s32.totalorder %s29, 0
      %p357 = por %p355, %p356
      %p358 = scmp.ne.s32.totalorder %s350, %s352
      %p359 = scmp.eq.s32.totalorder %s34, 3
      %p360 = por %p358, %p359
      %p361 = scmp.ne.s32.totalorder %s352, %s353
      %p362 = scmp.eq.s32.totalorder %s34, 0
      %p363 = por %p361, %p362
      %p364 = scmp.ne.s32.totalorder %s352, %s353
      %p365 = scmp.eq.s32.totalorder %s35, 3
      %p366 = por %p364, %p365
      %p368 = scmp.ne.s32.totalorder %s353, %s367
      %p369 = scmp.eq.s32.totalorder %s35, 0
      %p370 = por %p368, %p369
      %s371 = ssub.s32 %s36, %s48
      %p372 = scmp.eq.s32.totalorder %s371, 0
      %s374 = sadd.s32 %s373, 1
      %s375 = scalar_select %p372, %s373, %s374
      %p378 = pneg %p372
      %p379 = scmp.eq.s32.totalorder %s29, 3
      %p380 = por %p378, %p379
      %p381 = scmp.ne.s32.totalorder %s373, %s376
      %p382 = scmp.eq.s32.totalorder %s29, 0
      %p383 = por %p381, %p382
      %p384 = scmp.ne.s32.totalorder %s373, %s376
      %p385 = scmp.eq.s32.totalorder %s34, 3
      %p386 = por %p384, %p385
      %p387 = scmp.ne.s32.totalorder %s376, %s377
      %p388 = scmp.eq.s32.totalorder %s34, 0
      %p389 = por %p387, %p388
      %p390 = scmp.ne.s32.totalorder %s376, %s377
      %p391 = scmp.eq.s32.totalorder %s35, 3
      %p392 = por %p390, %p391
      %p394 = scmp.ne.s32.totalorder %s377, %s393
      %p395 = scmp.eq.s32.totalorder %s35, 0
      %p396 = por %p394, %p395
      %s397 = ssub.s32 %s36, %s48
      %p398 = scmp.eq.s32.totalorder %s397, 0
      %s400 = sadd.s32 %s399, 1
      %s401 = scalar_select %p398, %s399, %s400
      %p404 = pneg %p398
      %p405 = scmp.eq.s32.totalorder %s29, 3
      %p406 = por %p404, %p405
      %p407 = scmp.ne.s32.totalorder %s399, %s402
      %p408 = scmp.eq.s32.totalorder %s29, 0
      %p409 = por %p407, %p408
      %p410 = scmp.ne.s32.totalorder %s399, %s402
      %p411 = scmp.eq.s32.totalorder %s34, 3
      %p412 = por %p410, %p411
      %p413 = scmp.ne.s32.totalorder %s402, %s403
      %p414 = scmp.eq.s32.totalorder %s34, 0
      %p415 = por %p413, %p414
      %p416 = scmp.ne.s32.totalorder %s402, %s403
      %p417 = scmp.eq.s32.totalorder %s35, 3
      %p418 = por %p416, %p417
      %p420 = scmp.ne.s32.totalorder %s403, %s419
      %p421 = scmp.eq.s32.totalorder %s35, 0
      %p422 = por %p420, %p421
      %p423 = scmp.le.s32.totalorder 1, %s29
      %p424 = scmp.lt.s32.totalorder %s29, 5
      %p425 = pnand %p423, %p424
      %p426 = pneg %p425
      // Predicated region
      $region9: #{tpu_custom_call.1} parent=5 // pred_check
        _
      $region10: #{tpu_custom_call.1} parent=5 // pred_check_branch
        %428 = sbr.rel (%p425) target = $region12
      $region11: #{tpu_custom_call.1} parent=5 // pred_region
        %s429 = ssub.s32 %s29, 1
        // Predicated region
        $region13: #{tpu_custom_call.1} parent=11 // pred_check
          %p430 = pneg %p90
        $region14: #{tpu_custom_call.1} parent=11 // pred_check_branch
          %432 = sbr.rel (%p430) target = $region16
        $region15: #{tpu_custom_call.1} parent=11 // pred_region
          _
        $region16: #{tpu_custom_call.1} parent=11 // pred_fallthru
          _
        // Predicated region
        $region17: #{tpu_custom_call.1} parent=11 // pred_check
          %p433 = pneg %p111
        $region18: #{tpu_custom_call.1} parent=11 // pred_check_branch
          %435 = sbr.rel (%p433) target = $region20
        $region19: #{tpu_custom_call.1} parent=11 // pred_region
          _
        $region20: #{tpu_custom_call.1} parent=11 // pred_fallthru
          _
        // Predicated region
        $region21: #{tpu_custom_call.1} parent=11 // pred_check
          %p436 = pneg %p132
        $region22: #{tpu_custom_call.1} parent=11 // pred_check_branch
          %438 = sbr.rel (%p436) target = $region24
        $region23: #{tpu_custom_call.1} parent=11 // pred_region
          _
        $region24: #{tpu_custom_call.1} parent=11 // pred_fallthru
          _
        // Predicated region
        $region25: #{tpu_custom_call.1} parent=11 // pred_check
          %p439 = pneg %p153
        $region26: #{tpu_custom_call.1} parent=11 // pred_check_branch
          %441 = sbr.rel (%p439) target = $region28
        $region27: #{tpu_custom_call.1} parent=11 // pred_region
          _
        $region28: #{tpu_custom_call.1} parent=11 // pred_fallthru
          _
        // Predicated region
        $region29: #{tpu_custom_call.1} parent=11 // pred_check
          %p442 = pneg %p174
        $region30: #{tpu_custom_call.1} parent=11 // pred_check_branch
          %444 = sbr.rel (%p442) target = $region32
        $region31: #{tpu_custom_call.1} parent=11 // pred_region
          _
        $region32: #{tpu_custom_call.1} parent=11 // pred_fallthru
          _
        // Predicated region
        $region33: #{tpu_custom_call.1} parent=11 // pred_check
          %p445 = pneg %p195
        $region34: #{tpu_custom_call.1} parent=11 // pred_check_branch
          %447 = sbr.rel (%p445) target = $region36
        $region35: #{tpu_custom_call.1} parent=11 // pred_region
          _
        $region36: #{tpu_custom_call.1} parent=11 // pred_fallthru
          _
        // Predicated region
        $region37: #{tpu_custom_call.1} parent=11 // pred_check
          %p448 = pneg %p216
        $region38: #{tpu_custom_call.1} parent=11 // pred_check_branch
          %450 = sbr.rel (%p448) target = $region40
        $region39: #{tpu_custom_call.1} parent=11 // pred_region
          _
        $region40: #{tpu_custom_call.1} parent=11 // pred_fallthru
          _
        // Predicated region
        $region41: #{tpu_custom_call.1} parent=11 // pred_check
          %p451 = pneg %p237
        $region42: #{tpu_custom_call.1} parent=11 // pred_check_branch
          %453 = sbr.rel (%p451) target = $region44
        $region43: #{tpu_custom_call.1} parent=11 // pred_region
          _
        $region44: #{tpu_custom_call.1} parent=11 // pred_fallthru
          _
        // Predicated region
        $region45: #{tpu_custom_call.1} parent=11 // pred_check
          %p454 = pneg %p258
        $region46: #{tpu_custom_call.1} parent=11 // pred_check_branch
          %456 = sbr.rel (%p454) target = $region48
        $region47: #{tpu_custom_call.1} parent=11 // pred_region
          _
        $region48: #{tpu_custom_call.1} parent=11 // pred_fallthru
          _
        // Predicated region
        $region49: #{tpu_custom_call.1} parent=11 // pred_check
          %p457 = pneg %p279
        $region50: #{tpu_custom_call.1} parent=11 // pred_check_branch
          %459 = sbr.rel (%p457) target = $region52
        $region51: #{tpu_custom_call.1} parent=11 // pred_region
          _
        $region52: #{tpu_custom_call.1} parent=11 // pred_fallthru
          _
        // Predicated region
        $region53: #{tpu_custom_call.1} parent=11 // pred_check
          %p460 = pneg %p300
        $region54: #{tpu_custom_call.1} parent=11 // pred_check_branch
          %462 = sbr.rel (%p460) target = $region56
        $region55: #{tpu_custom_call.1} parent=11 // pred_region
          _
        $region56: #{tpu_custom_call.1} parent=11 // pred_fallthru
          _
        // Predicated region
        $region57: #{tpu_custom_call.1} parent=11 // pred_check
          %p463 = pneg %p321
        $region58: #{tpu_custom_call.1} parent=11 // pred_check_branch
          %465 = sbr.rel (%p463) target = $region60
        $region59: #{tpu_custom_call.1} parent=11 // pred_region
          _
        $region60: #{tpu_custom_call.1} parent=11 // pred_fallthru
          _
        // Predicated region
        $region61: #{tpu_custom_call.1} parent=11 // pred_check
          %p466 = pneg %p342
        $region62: #{tpu_custom_call.1} parent=11 // pred_check_branch
          %468 = sbr.rel (%p466) target = $region64
        $region63: #{tpu_custom_call.1} parent=11 // pred_region
          _
        $region64: #{tpu_custom_call.1} parent=11 // pred_fallthru
          _
        // Predicated region
        $region65: #{tpu_custom_call.1} parent=11 // pred_check
          %p469 = pneg %p363
        $region66: #{tpu_custom_call.1} parent=11 // pred_check_branch
          %471 = sbr.rel (%p469) target = $region68
        $region67: #{tpu_custom_call.1} parent=11 // pred_region
          _
        $region68: #{tpu_custom_call.1} parent=11 // pred_fallthru
          _
      $region12: #{tpu_custom_call.1} parent=5 // pred_fallthru
        _
      %p472 = scmp.lt.s32.totalorder %s29, 4
      // Predicated region
      $region69: #{tpu_custom_call.1} parent=5 // pred_check
        %p473 = pneg %p472
      $region70: #{tpu_custom_call.1} parent=5 // pred_check_branch
        %475 = sbr.rel (%p473) target = $region72
      $region71: #{tpu_custom_call.1} parent=5 // pred_region
        // Predicated region
        $region73: #{tpu_custom_call.1} parent=71 // pred_check
          %p476 = pneg %p63
        $region74: #{tpu_custom_call.1} parent=71 // pred_check_branch
          %478 = sbr.rel (%p476) target = $region76
        $region75: #{tpu_custom_call.1} parent=71 // pred_region
          %s479 = smul.u32 16, %s37
          %p480 = scmp.lt.s32.totalorder %s36, 1
          %s481 = scalar_select %p480, %s36, 1
          %p482 = scmp.lt.s32.totalorder %s479, 31
          %s483 = scalar_select %p482, %s479, 31
          %s484 = smul.addr %s481, 32
          %s485 = sadd.s32 %s483, %s484
          %s486 = smul.addr %s485, 4
          %s487 = scalar_lea.vmem %s0, %s486
          %s488 = smul.u32 16, %s37
        $region76: #{tpu_custom_call.1} parent=71 // pred_fallthru
          _
      $region72: #{tpu_custom_call.1} parent=5 // pred_fallthru
        _
      %p489 = scmp.le.s32.totalorder 1, %s29
      %p490 = scmp.lt.s32.totalorder %s29, 5
      %p491 = pnand %p489, %p490
      %p492 = pneg %p491
      // Predicated region
      $region77: #{tpu_custom_call.1} parent=5 // pred_check
        _
      $region78: #{tpu_custom_call.1} parent=5 // pred_check_branch
        %494 = sbr.rel (%p491) target = $region80
      $region79: #{tpu_custom_call.1} parent=5 // pred_region
        %s495 = ssub.s32 %s29, 1
        %s496 = smul.u32 16, %s39
        %p497 = scmp.lt.s32.totalorder %s38, 1
        %s498 = scalar_select %p497, %s38, 1
        %p499 = scmp.lt.s32.totalorder %s496, 31
        %s500 = scalar_select %p499, %s496, 31
        %s501 = smul.addr %s498, 32
        %s502 = sadd.s32 %s500, %s501
        %s503 = smul.addr %s502, 4
        %s504 = scalar_lea.vmem %s0, %s503
        %p505 = pneg %p69
        %p506 = pneg %p66
        %p507 = pneg %p90
        %p508 = pneg %p87
        %p509 = pneg %p111
        %p510 = pneg %p108
        %p511 = pneg %p132
        %p512 = pneg %p129
        %p513 = pneg %p153
        %p514 = pneg %p150
        %p515 = pneg %p174
        %p516 = pneg %p171
        %p517 = pneg %p195
        %p518 = pneg %p192
        %p519 = pneg %p216
        %p520 = pneg %p213
        %p521 = pneg %p237
        %p522 = pneg %p234
        %p523 = pneg %p258
        %p524 = pneg %p255
        %p525 = pneg %p279
        %p526 = pneg %p276
        %p527 = pneg %p300
        %p528 = pneg %p297
        %p529 = pneg %p321
        %p530 = pneg %p318
        %p531 = pneg %p342
        %p532 = pneg %p339
        %p533 = pneg %p363
        %p534 = pneg %p360
        %p535 = pneg %p389
        %p536 = pneg %p386
        %s537 = sand.u32 %s376, 1
        %s538 = scalar_lea.sflag [#allocation4], %s537
        %s539 = sand.u32 %s376, 1
        %s540 = scalar_lea.vmem [#allocation3], %s539
        %p541 = pneg %p415
        %p542 = pneg %p412
        %s543 = sand.u32 %s402, 1
        %s544 = scalar_lea.sflag [#allocation6], %s543
        %s545 = sand.u32 %s402, 1
        %s546 = scalar_lea.vmem [#allocation5], %s545
        %s547 = smul.u32 16, %s39
        %p548 = scmp.lt.s32.totalorder %s38, 1
        %s549 = scalar_select %p548, %s38, 1
        %p550 = scmp.lt.s32.totalorder %s547, 31
        %s551 = scalar_select %p550, %s547, 31
        %s552 = smul.addr %s549, 32
        %s553 = sadd.s32 %s551, %s552
        %s554 = smul.addr %s553, 4
        %s555 = scalar_lea.vmem %s0, %s554
        %s556 = smul.u32 16, %s39
        %p558 = scmp.eq.s32.totalorder %s39, 0
        // Predicated region
        $region81: #{tpu_custom_call.1} parent=79 // pred_check
          %p559 = pneg %p558
        $region82: #{tpu_custom_call.1} parent=79 // pred_check_branch
          %561 = sbr.rel (%p559) target = $region84
        $region83: #{tpu_custom_call.1} parent=79 // pred_region
          %562 = vst [vmem:[%s540] sm:$0x1] -inf
          %563 = vst [vmem:[#allocation2] sm:$0x1] -inf
        $region84: #{tpu_custom_call.1} parent=79 // pred_fallthru
          _
        %v564 = vld [vmem:[%s555] sm:$0xf]
        %v565 = vld [vmem:[%s555 + $0x4] sm:$0xf]
        %v566 = vld [vmem:[%s555 + $0x8] sm:$0xf]
        %v567 = vld [vmem:[%s555 + $0xc] sm:$0xf]
        %v568 = vld [vmem:[%s555 + $0x10] sm:$0xf]
        %v569 = vld [vmem:[%s555 + $0x14] sm:$0xf]
        %v570 = vld [vmem:[%s555 + $0x18] sm:$0xf]
        %v571 = vld [vmem:[%s555 + $0x1c] sm:$0xf]
        %v572 = vld [vmem:[%s555 + $0x20] sm:$0xf]
        %v573 = vld [vmem:[%s555 + $0x24] sm:$0xf]
        %v574 = vld [vmem:[%s555 + $0x28] sm:$0xf]
        %v575 = vld [vmem:[%s555 + $0x2c] sm:$0xf]
        %v576 = vld [vmem:[%s555 + $0x30] sm:$0xf]
        %v577 = vld [vmem:[%s555 + $0x34] sm:$0xf]
        %v578 = vld [vmem:[%s555 + $0x38] sm:$0xf]
        %v579 = vld [vmem:[%s555 + $0x3c] sm:$0xf]
        %v580 = vld [vmem:[%s1] sm:$0xff]
        %v581 = vld [vmem:[%s1 + $0x8] sm:$0xff]
        %v582 = vld [vmem:[%s2] sm:$0x3]
        %v584 = vperm.slane %v582, 0
        %v585 = vperm.slane %v582, 1
        %v604 = vunpack.c.l.b16 %v564
        %v605 = vunpack.c.l.b16 %v565
        %v606 = vunpack.c.l.b16 %v566
        %v607 = vunpack.c.l.b16 %v567
        %v608 = vunpack.c.l.b16 %v568
        %v609 = vunpack.c.l.b16 %v569
        %v610 = vunpack.c.l.b16 %v570
        %v611 = vunpack.c.l.b16 %v571
        %v612 = vunpack.c.l.b16 %v572
        %v613 = vunpack.c.l.b16 %v573
        %v614 = vunpack.c.l.b16 %v574
        %v615 = vunpack.c.l.b16 %v575
        %v616 = vunpack.c.l.b16 %v576
        %v617 = vunpack.c.l.b16 %v577
        %v618 = vunpack.c.l.b16 %v578
        %v619 = vunpack.c.l.b16 %v579
        %v620 = vpack.c.b16 %v605, %v604
        %v621 = vpack.c.b16 %v607, %v606
        %v622 = vpack.c.b16 %v609, %v608
        %v623 = vpack.c.b16 %v611, %v610
        %v624 = vpack.c.b16 %v613, %v612
        %v625 = vpack.c.b16 %v615, %v614
        %v626 = vpack.c.b16 %v617, %v616
        %v627 = vpack.c.b16 %v619, %v618
        %v630 = vunpack.c.l.b16 %v580
        %v631 = vunpack.c.h.b16 %v580
        %v632 = vunpack.c.l.b16 %v581
        %v633 = vunpack.c.h.b16 %v581
        %v634 = vpack.c.b16 %v632, %v630
        %v635 = vpack.c.b16 %v633, %v631
        %vm638 = vcmask 130048
        %v640 = vsel %vm638, %v620, 0
        %v643 = vsel %vm638, %v621, 0
        %v646 = vsel %vm638, %v622, 0
        %v649 = vsel %vm638, %v623, 0
        %v652 = vsel %vm638, %v624, 0
        %v655 = vsel %vm638, %v625, 0
        %v658 = vsel %vm638, %v626, 0
        %v661 = vsel %vm638, %v627, 0
        %663 = vmatpush.bf16.msra.mxu0 0
        %664 = vmatpush.bf16.msra.mxu0 0
        %665 = vmatpush.bf16.msra.mxu0 0
        %666 = vmatpush.bf16.msra.mxu0 0
        %667 = vmatpush.bf16.msra.mxu0 0
        %668 = vmatpush.bf16.msra.mxu0 0
        %669 = vmatpush.bf16.msra.mxu0 0
        %670 = vmatpush.bf16.msra.mxu0 %v634
        %671 = vmatmul.bf16.gmra.mxu0 %v640
        %v672 = vpop.f32.mrf.mxu0
        %v673 = vadd.f32 %v584, %v672
        %v674 = vpop.f32.mrf.mxu0
        %v675 = vadd.f32 %v584, %v674
        %676 = vmatmul.bf16.gmra.mxu0 %v643
        %v677 = vpop.f32.mrf.mxu0
        %v678 = vadd.f32 %v584, %v677
        %v679 = vpop.f32.mrf.mxu0
        %v680 = vadd.f32 %v584, %v679
        %681 = vmatmul.bf16.gmra.mxu0 %v646
        %v682 = vpop.f32.mrf.mxu0
        %v683 = vadd.f32 %v584, %v682
        %v684 = vpop.f32.mrf.mxu0
        %v685 = vadd.f32 %v584, %v684
        %686 = vmatmul.bf16.gmra.mxu0 %v649
        %v687 = vpop.f32.mrf.mxu0
        %v688 = vadd.f32 %v584, %v687
        %v689 = vpop.f32.mrf.mxu0
        %v690 = vadd.f32 %v584, %v689
        %691 = vmatmul.bf16.gmra.mxu0 %v652
        %v692 = vpop.f32.mrf.mxu0
        %v693 = vadd.f32 %v584, %v692
        %v694 = vpop.f32.mrf.mxu0
        %v695 = vadd.f32 %v584, %v694
        %696 = vmatmul.bf16.gmra.mxu0 %v655
        %v697 = vpop.f32.mrf.mxu0
        %v698 = vadd.f32 %v584, %v697
        %v699 = vpop.f32.mrf.mxu0
        %v700 = vadd.f32 %v584, %v699
        %701 = vmatmul.bf16.gmra.mxu0 %v658
        %v702 = vpop.f32.mrf.mxu0
        %v703 = vadd.f32 %v584, %v702
        %v704 = vpop.f32.mrf.mxu0
        %v705 = vadd.f32 %v584, %v704
        %706 = vmatmul.bf16.gmra.mxu0 %v661
        %v707 = vpop.f32.mrf.mxu0
        %v708 = vadd.f32 %v584, %v707
        %v709 = vpop.f32.mrf.mxu0
        %v710 = vadd.f32 %v584, %v709
        %711 = vdwg.mxu0
        %712 = vmatpush.bf16.msra.mxu0 0
        %713 = vmatpush.bf16.msra.mxu0 0
        %714 = vmatpush.bf16.msra.mxu0 0
        %715 = vmatpush.bf16.msra.mxu0 0
        %716 = vmatpush.bf16.msra.mxu0 0
        %717 = vmatpush.bf16.msra.mxu0 0
        %718 = vmatpush.bf16.msra.mxu0 0
        %719 = vmatpush.bf16.msra.mxu0 %v635
        %720 = vmatmul.bf16.gmra.mxu0 %v640
        %v721 = vpop.f32.mrf.mxu0
        %v722 = vadd.f32 %v585, %v721
        %v723 = vpop.f32.mrf.mxu0
        %v724 = vadd.f32 %v585, %v723
        %725 = vmatmul.bf16.gmra.mxu0 %v643
        %v726 = vpop.f32.mrf.mxu0
        %v727 = vadd.f32 %v585, %v726
        %v728 = vpop.f32.mrf.mxu0
        %v729 = vadd.f32 %v585, %v728
        %730 = vmatmul.bf16.gmra.mxu0 %v646
        %v731 = vpop.f32.mrf.mxu0
        %v732 = vadd.f32 %v585, %v731
        %v733 = vpop.f32.mrf.mxu0
        %v734 = vadd.f32 %v585, %v733
        %735 = vmatmul.bf16.gmra.mxu0 %v649
        %v736 = vpop.f32.mrf.mxu0
        %v737 = vadd.f32 %v585, %v736
        %v738 = vpop.f32.mrf.mxu0
        %v739 = vadd.f32 %v585, %v738
        %740 = vmatmul.bf16.gmra.mxu0 %v652
        %v741 = vpop.f32.mrf.mxu0
        %v742 = vadd.f32 %v585, %v741
        %v743 = vpop.f32.mrf.mxu0
        %v744 = vadd.f32 %v585, %v743
        %745 = vmatmul.bf16.gmra.mxu0 %v655
        %v746 = vpop.f32.mrf.mxu0
        %v747 = vadd.f32 %v585, %v746
        %v748 = vpop.f32.mrf.mxu0
        %v749 = vadd.f32 %v585, %v748
        %750 = vmatmul.bf16.gmra.mxu0 %v658
        %v751 = vpop.f32.mrf.mxu0
        %v752 = vadd.f32 %v585, %v751
        %v753 = vpop.f32.mrf.mxu0
        %v754 = vadd.f32 %v585, %v753
        %755 = vmatmul.bf16.gmra.mxu0 %v661
        %v756 = vpop.f32.mrf.mxu0
        %v757 = vadd.f32 %v585, %v756
        %v758 = vpop.f32.mrf.mxu0
        %v759 = vadd.f32 %v585, %v758
        %760 = vdwg.mxu0
        %v761 = vmax.f32 %v673, 0.0
        %v762 = vmax.f32 %v722, 0.0
        %v763 = vmax.f32 %v675, 0.0
        %v764 = vmax.f32 %v724, 0.0
        %v765 = vmax.f32 %v678, 0.0
        %v766 = vmax.f32 %v727, 0.0
        %v767 = vmax.f32 %v680, 0.0
        %v768 = vmax.f32 %v729, 0.0
        %v769 = vmax.f32 %v683, 0.0
        %v770 = vmax.f32 %v732, 0.0
        %v771 = vmax.f32 %v685, 0.0
        %v772 = vmax.f32 %v734, 0.0
        %v773 = vmax.f32 %v688, 0.0
        %v774 = vmax.f32 %v737, 0.0
        %v775 = vmax.f32 %v690, 0.0
        %v776 = vmax.f32 %v739, 0.0
        %v777 = vmax.f32 %v693, 0.0
        %v778 = vmax.f32 %v742, 0.0
        %v779 = vmax.f32 %v695, 0.0
        %v780 = vmax.f32 %v744, 0.0
        %v781 = vmax.f32 %v698, 0.0
        %v782 = vmax.f32 %v747, 0.0
        %v783 = vmax.f32 %v700, 0.0
        %v784 = vmax.f32 %v749, 0.0
        %v785 = vmax.f32 %v703, 0.0
        %v786 = vmax.f32 %v752, 0.0
        %v787 = vmax.f32 %v705, 0.0
        %v788 = vmax.f32 %v754, 0.0
        %v789 = vmax.f32 %v708, 0.0
        %v790 = vmax.f32 %v757, 0.0
        %v791 = vmax.f32 %v710, 0.0
        %v792 = vmax.f32 %v759, 0.0
        %v793 = vpack.c.bf16 %v762, %v761
        %v794 = vpack.c.bf16 %v764, %v763
        %v795 = vpack.c.bf16 %v766, %v765
        %v796 = vpack.c.bf16 %v768, %v767
        %v797 = vpack.c.bf16 %v770, %v769
        %v798 = vpack.c.bf16 %v772, %v771
        %v799 = vpack.c.bf16 %v774, %v773
        %v800 = vpack.c.bf16 %v776, %v775
        %v801 = vpack.c.bf16 %v778, %v777
        %v802 = vpack.c.bf16 %v780, %v779
        %v803 = vpack.c.bf16 %v782, %v781
        %v804 = vpack.c.bf16 %v784, %v783
        %v805 = vpack.c.bf16 %v786, %v785
        %v806 = vpack.c.bf16 %v788, %v787
        %v807 = vpack.c.bf16 %v790, %v789
        %v808 = vpack.c.bf16 %v792, %v791
        %v809 = vlaneseq
        %v810 = vshrl.u32 %v809, 7
        %v811 = vadd.s32 %v810, 8
        %v812 = vadd.s32 %v810, 16
        %v813 = vadd.s32 %v810, 24
        %v814 = vadd.s32 %v810, 32
        %v815 = vadd.s32 %v810, 40
        %v816 = vadd.s32 %v810, 48
        %v817 = vadd.s32 %v810, 56
        %v818 = vadd.s32 %v810, 64
        %v819 = vadd.s32 %v810, 72
        %v820 = vadd.s32 %v810, 80
        %v821 = vadd.s32 %v810, 88
        %v822 = vadd.s32 %v810, 96
        %v823 = vadd.s32 %v810, 104
        %v824 = vadd.s32 %v810, 112
        %v825 = vadd.s32 %v810, 120
        %s826 = smul.u32 %s39, 128
        %v827 = vstv %s826
        %v828 = vadd.s32 %v810, %v827
        %v829 = vadd.s32 %v811, %v827
        %v830 = vadd.s32 %v812, %v827
        %v831 = vadd.s32 %v813, %v827
        %v832 = vadd.s32 %v814, %v827
        %v833 = vadd.s32 %v815, %v827
        %v834 = vadd.s32 %v816, %v827
        %v835 = vadd.s32 %v817, %v827
        %v836 = vadd.s32 %v818, %v827
        %v837 = vadd.s32 %v819, %v827
        %v838 = vadd.s32 %v820, %v827
        %v839 = vadd.s32 %v821, %v827
        %v840 = vadd.s32 %v822, %v827
        %v841 = vadd.s32 %v823, %v827
        %v842 = vadd.s32 %v824, %v827
        %v843 = vadd.s32 %v825, %v827
        %vm844 = vcmp.lt.s32.totalorder %v828, 256
        %vm845 = vcmp.lt.s32.totalorder %v829, 256
        %vm846 = vcmp.lt.s32.totalorder %v830, 256
        %vm847 = vcmp.lt.s32.totalorder %v831, 256
        %vm848 = vcmp.lt.s32.totalorder %v832, 256
        %vm849 = vcmp.lt.s32.totalorder %v833, 256
        %vm850 = vcmp.lt.s32.totalorder %v834, 256
        %vm851 = vcmp.lt.s32.totalorder %v835, 256
        %vm852 = vcmp.lt.s32.totalorder %v836, 256
        %vm853 = vcmp.lt.s32.totalorder %v837, 256
        %vm854 = vcmp.lt.s32.totalorder %v838, 256
        %vm855 = vcmp.lt.s32.totalorder %v839, 256
        %vm856 = vcmp.lt.s32.totalorder %v840, 256
        %vm857 = vcmp.lt.s32.totalorder %v841, 256
        %vm858 = vcmp.lt.s32.totalorder %v842, 256
        %vm859 = vcmp.lt.s32.totalorder %v843, 256
        %v860 = vld [vmem:[%s3] sm:$0xf]
        %v861 = vld [vmem:[%s3 + $0x4] sm:$0xf]
        %v862 = vld [vmem:[%s3 + $0x8] sm:$0xf]
        %v863 = vld [vmem:[%s3 + $0xc] sm:$0xf]
        %v864 = vld [vmem:[%s3 + $0x10] sm:$0xf]
        %v865 = vld [vmem:[%s3 + $0x14] sm:$0xf]
        %v866 = vld [vmem:[%s3 + $0x18] sm:$0xf]
        %v867 = vld [vmem:[%s3 + $0x1c] sm:$0xf]
        %v868 = vld [vmem:[%s3 + $0x20] sm:$0xf]
        %v869 = vld [vmem:[%s3 + $0x24] sm:$0xf]
        %v870 = vld [vmem:[%s3 + $0x28] sm:$0xf]
        %v871 = vld [vmem:[%s3 + $0x2c] sm:$0xf]
        %v872 = vld [vmem:[%s3 + $0x30] sm:$0xf]
        %v873 = vld [vmem:[%s3 + $0x34] sm:$0xf]
        %v874 = vld [vmem:[%s3 + $0x38] sm:$0xf]
        %v875 = vld [vmem:[%s3 + $0x3c] sm:$0xf]
        %v876 = vld [vmem:[%s4] sm:$0x1]
        %v878 = vperm.slane %v876, 0
        %v896 = vunpack.c.l.b16 %v793
        %v897 = vunpack.c.l.b16 %v794
        %v898 = vunpack.c.l.b16 %v795
        %v899 = vunpack.c.l.b16 %v796
        %v900 = vunpack.c.l.b16 %v797
        %v901 = vunpack.c.l.b16 %v798
        %v902 = vunpack.c.l.b16 %v799
        %v903 = vunpack.c.l.b16 %v800
        %v904 = vunpack.c.l.b16 %v801
        %v905 = vunpack.c.l.b16 %v802
        %v906 = vunpack.c.l.b16 %v803
        %v907 = vunpack.c.l.b16 %v804
        %v908 = vunpack.c.l.b16 %v805
        %v909 = vunpack.c.l.b16 %v806
        %v910 = vunpack.c.l.b16 %v807
        %v911 = vunpack.c.l.b16 %v808
        %v912 = vpack.c.b16 %v897, %v896
        %v913 = vpack.c.b16 %v899, %v898
        %v914 = vpack.c.b16 %v901, %v900
        %v915 = vpack.c.b16 %v903, %v902
        %v916 = vpack.c.b16 %v905, %v904
        %v917 = vpack.c.b16 %v907, %v906
        %v918 = vpack.c.b16 %v909, %v908
        %v919 = vpack.c.b16 %v911, %v910
        %v944 = vunpack.c.l.b16 %v860
        %v945 = vunpack.c.l.b16 %v861
        %v946 = vunpack.c.l.b16 %v862
        %v947 = vunpack.c.l.b16 %v863
        %v948 = vunpack.c.l.b16 %v864
        %v949 = vunpack.c.l.b16 %v865
        %v950 = vunpack.c.l.b16 %v866
        %v951 = vunpack.c.l.b16 %v867
        %v952 = vunpack.c.l.b16 %v868
        %v953 = vunpack.c.l.b16 %v869
        %v954 = vunpack.c.l.b16 %v870
        %v955 = vunpack.c.l.b16 %v871
        %v956 = vunpack.c.l.b16 %v872
        %v957 = vunpack.c.l.b16 %v873
        %v958 = vunpack.c.l.b16 %v874
        %v959 = vunpack.c.l.b16 %v875
        %v960 = vpack.c.b16 %v945, %v944
        %v961 = vpack.c.b16 %v947, %v946
        %v962 = vpack.c.b16 %v949, %v948
        %v963 = vpack.c.b16 %v951, %v950
        %v964 = vpack.c.b16 %v953, %v952
        %v965 = vpack.c.b16 %v955, %v954
        %v966 = vpack.c.b16 %v957, %v956
        %v967 = vpack.c.b16 %v959, %v958
        %976 = vmatpush.bf16.msra.mxu0 %v967
        %977 = vmatpush.bf16.msra.mxu0 %v966
        %978 = vmatpush.bf16.msra.mxu0 %v965
        %979 = vmatpush.bf16.msra.mxu0 %v964
        %980 = vmatpush.bf16.msra.mxu0 %v963
        %981 = vmatpush.bf16.msra.mxu0 %v962
        %982 = vmatpush.bf16.msra.mxu0 %v961
        %983 = vmatpush.bf16.msra.mxu0 %v960
        %984 = vmatmul.bf16.gmra.mxu0 %v912
        %v985 = vpop.f32.mrf.mxu0
        %v986 = vadd.f32 %v878, %v985
        %v987 = vpop.f32.mrf.mxu0
        %v988 = vadd.f32 %v878, %v987
        %989 = vmatmul.bf16.gmra.mxu0 %v913
        %v990 = vpop.f32.mrf.mxu0
        %v991 = vadd.f32 %v878, %v990
        %v992 = vpop.f32.mrf.mxu0
        %v993 = vadd.f32 %v878, %v992
        %994 = vmatmul.bf16.gmra.mxu0 %v914
        %v995 = vpop.f32.mrf.mxu0
        %v996 = vadd.f32 %v878, %v995
        %v997 = vpop.f32.mrf.mxu0
        %v998 = vadd.f32 %v878, %v997
        %999 = vmatmul.bf16.gmra.mxu0 %v915
        %v1000 = vpop.f32.mrf.mxu0
        %v1001 = vadd.f32 %v878, %v1000
        %v1002 = vpop.f32.mrf.mxu0
        %v1003 = vadd.f32 %v878, %v1002
        %1004 = vmatmul.bf16.gmra.mxu0 %v916
        %v1005 = vpop.f32.mrf.mxu0
        %v1006 = vadd.f32 %v878, %v1005
        %v1007 = vpop.f32.mrf.mxu0
        %v1008 = vadd.f32 %v878, %v1007
        %1009 = vmatmul.bf16.gmra.mxu0 %v917
        %v1010 = vpop.f32.mrf.mxu0
        %v1011 = vadd.f32 %v878, %v1010
        %v1012 = vpop.f32.mrf.mxu0
        %v1013 = vadd.f32 %v878, %v1012
        %1014 = vmatmul.bf16.gmra.mxu0 %v918
        %v1015 = vpop.f32.mrf.mxu0
        %v1016 = vadd.f32 %v878, %v1015
        %v1017 = vpop.f32.mrf.mxu0
        %v1018 = vadd.f32 %v878, %v1017
        %1019 = vmatmul.bf16.gmra.mxu0 %v919
        %v1020 = vpop.f32.mrf.mxu0
        %v1021 = vadd.f32 %v878, %v1020
        %v1022 = vpop.f32.mrf.mxu0
        %v1023 = vadd.f32 %v878, %v1022
        %1024 = vdwg.mxu0
        %v1025 = vmax.f32 %v986, 0.0
        %v1026 = vmax.f32 %v988, 0.0
        %v1027 = vmax.f32 %v991, 0.0
        %v1028 = vmax.f32 %v993, 0.0
        %v1029 = vmax.f32 %v996, 0.0
        %v1030 = vmax.f32 %v998, 0.0
        %v1031 = vmax.f32 %v1001, 0.0
        %v1032 = vmax.f32 %v1003, 0.0
        %v1033 = vmax.f32 %v1006, 0.0
        %v1034 = vmax.f32 %v1008, 0.0
        %v1035 = vmax.f32 %v1011, 0.0
        %v1036 = vmax.f32 %v1013, 0.0
        %v1037 = vmax.f32 %v1016, 0.0
        %v1038 = vmax.f32 %v1018, 0.0
        %v1039 = vmax.f32 %v1021, 0.0
        %v1040 = vmax.f32 %v1023, 0.0
        %v1041 = vpack.c.bf16 %v1026, %v1025
        %v1042 = vpack.c.bf16 %v1028, %v1027
        %v1043 = vpack.c.bf16 %v1030, %v1029
        %v1044 = vpack.c.bf16 %v1032, %v1031
        %v1045 = vpack.c.bf16 %v1034, %v1033
        %v1046 = vpack.c.bf16 %v1036, %v1035
        %v1047 = vpack.c.bf16 %v1038, %v1037
        %v1048 = vpack.c.bf16 %v1040, %v1039
        %v1049 = vld [vmem:[%s5] sm:$0xf]
        %v1050 = vld [vmem:[%s5 + $0x4] sm:$0xf]
        %v1051 = vld [vmem:[%s5 + $0x8] sm:$0xf]
        %v1052 = vld [vmem:[%s5 + $0xc] sm:$0xf]
        %v1053 = vld [vmem:[%s5 + $0x10] sm:$0xf]
        %v1054 = vld [vmem:[%s5 + $0x14] sm:$0xf]
        %v1055 = vld [vmem:[%s5 + $0x18] sm:$0xf]
        %v1056 = vld [vmem:[%s5 + $0x1c] sm:$0xf]
        %v1057 = vld [vmem:[%s5 + $0x20] sm:$0xf]
        %v1058 = vld [vmem:[%s5 + $0x24] sm:$0xf]
        %v1059 = vld [vmem:[%s5 + $0x28] sm:$0xf]
        %v1060 = vld [vmem:[%s5 + $0x2c] sm:$0xf]
        %v1061 = vld [vmem:[%s5 + $0x30] sm:$0xf]
        %v1062 = vld [vmem:[%s5 + $0x34] sm:$0xf]
        %v1063 = vld [vmem:[%s5 + $0x38] sm:$0xf]
        %v1064 = vld [vmem:[%s5 + $0x3c] sm:$0xf]
        %v1065 = vld [vmem:[%s6] sm:$0x1]
        %v1067 = vperm.slane %v1065, 0
        %v1085 = vunpack.c.l.b16 %v1049
        %v1086 = vunpack.c.l.b16 %v1050
        %v1087 = vunpack.c.l.b16 %v1051
        %v1088 = vunpack.c.l.b16 %v1052
        %v1089 = vunpack.c.l.b16 %v1053
        %v1090 = vunpack.c.l.b16 %v1054
        %v1091 = vunpack.c.l.b16 %v1055
        %v1092 = vunpack.c.l.b16 %v1056
        %v1093 = vunpack.c.l.b16 %v1057
        %v1094 = vunpack.c.l.b16 %v1058
        %v1095 = vunpack.c.l.b16 %v1059
        %v1096 = vunpack.c.l.b16 %v1060
        %v1097 = vunpack.c.l.b16 %v1061
        %v1098 = vunpack.c.l.b16 %v1062
        %v1099 = vunpack.c.l.b16 %v1063
        %v1100 = vunpack.c.l.b16 %v1064
        %v1101 = vpack.c.b16 %v1086, %v1085
        %v1102 = vpack.c.b16 %v1088, %v1087
        %v1103 = vpack.c.b16 %v1090, %v1089
        %v1104 = vpack.c.b16 %v1092, %v1091
        %v1105 = vpack.c.b16 %v1094, %v1093
        %v1106 = vpack.c.b16 %v1096, %v1095
        %v1107 = vpack.c.b16 %v1098, %v1097
        %v1108 = vpack.c.b16 %v1100, %v1099
        %1117 = vmatpush.bf16.msra.mxu0 %v1108
        %1118 = vmatpush.bf16.msra.mxu0 %v1107
        %1119 = vmatpush.bf16.msra.mxu0 %v1106
        %1120 = vmatpush.bf16.msra.mxu0 %v1105
        %1121 = vmatpush.bf16.msra.mxu0 %v1104
        %1122 = vmatpush.bf16.msra.mxu0 %v1103
        %1123 = vmatpush.bf16.msra.mxu0 %v1102
        %1124 = vmatpush.bf16.msra.mxu0 %v1101
        %1125 = vmatmul.bf16.gmra.mxu0 %v1041
        %v1126 = vpop.f32.mrf.mxu0
        %v1127 = vadd.f32 %v1067, %v1126
        %v1128 = vpop.f32.mrf.mxu0
        %v1129 = vadd.f32 %v1067, %v1128
        %1130 = vmatmul.bf16.gmra.mxu0 %v1042
        %v1131 = vpop.f32.mrf.mxu0
        %v1132 = vadd.f32 %v1067, %v1131
        %v1133 = vpop.f32.mrf.mxu0
        %v1134 = vadd.f32 %v1067, %v1133
        %1135 = vmatmul.bf16.gmra.mxu0 %v1043
        %v1136 = vpop.f32.mrf.mxu0
        %v1137 = vadd.f32 %v1067, %v1136
        %v1138 = vpop.f32.mrf.mxu0
        %v1139 = vadd.f32 %v1067, %v1138
        %1140 = vmatmul.bf16.gmra.mxu0 %v1044
        %v1141 = vpop.f32.mrf.mxu0
        %v1142 = vadd.f32 %v1067, %v1141
        %v1143 = vpop.f32.mrf.mxu0
        %v1144 = vadd.f32 %v1067, %v1143
        %1145 = vmatmul.bf16.gmra.mxu0 %v1045
        %v1146 = vpop.f32.mrf.mxu0
        %v1147 = vadd.f32 %v1067, %v1146
        %v1148 = vpop.f32.mrf.mxu0
        %v1149 = vadd.f32 %v1067, %v1148
        %1150 = vmatmul.bf16.gmra.mxu0 %v1046
        %v1151 = vpop.f32.mrf.mxu0
        %v1152 = vadd.f32 %v1067, %v1151
        %v1153 = vpop.f32.mrf.mxu0
        %v1154 = vadd.f32 %v1067, %v1153
        %1155 = vmatmul.bf16.gmra.mxu0 %v1047
        %v1156 = vpop.f32.mrf.mxu0
        %v1157 = vadd.f32 %v1067, %v1156
        %v1158 = vpop.f32.mrf.mxu0
        %v1159 = vadd.f32 %v1067, %v1158
        %1160 = vmatmul.bf16.gmra.mxu0 %v1048
        %v1161 = vpop.f32.mrf.mxu0
        %v1162 = vadd.f32 %v1067, %v1161
        %v1163 = vpop.f32.mrf.mxu0
        %v1164 = vadd.f32 %v1067, %v1163
        %1165 = vdwg.mxu0
        %v1166 = vld [vmem:[%s540] sm:$0x1]
        %v1167 = vsel %vm844, 1, 0
        %v1168 = vsel %vm845, 1, 0
        %v1169 = vsel %vm846, 1, 0
        %v1170 = vsel %vm847, 1, 0
        %v1171 = vsel %vm848, 1, 0
        %v1172 = vsel %vm849, 1, 0
        %v1173 = vsel %vm850, 1, 0
        %v1174 = vsel %vm851, 1, 0
        %v1175 = vsel %vm852, 1, 0
        %v1176 = vsel %vm853, 1, 0
        %v1177 = vsel %vm854, 1, 0
        %v1178 = vsel %vm855, 1, 0
        %v1179 = vsel %vm856, 1, 0
        %v1180 = vsel %vm857, 1, 0
        %v1181 = vsel %vm858, 1, 0
        %v1182 = vsel %vm859, 1, 0
        %vm1183 = vcmp.eq.s32.totalorder %v1167, 1
        %vm1184 = vcmp.eq.s32.totalorder %v1168, 1
        %vm1185 = vcmp.eq.s32.totalorder %v1169, 1
        %vm1186 = vcmp.eq.s32.totalorder %v1170, 1
        %vm1187 = vcmp.eq.s32.totalorder %v1171, 1
        %vm1188 = vcmp.eq.s32.totalorder %v1172, 1
        %vm1189 = vcmp.eq.s32.totalorder %v1173, 1
        %vm1190 = vcmp.eq.s32.totalorder %v1174, 1
        %vm1191 = vcmp.eq.s32.totalorder %v1175, 1
        %vm1192 = vcmp.eq.s32.totalorder %v1176, 1
        %vm1193 = vcmp.eq.s32.totalorder %v1177, 1
        %vm1194 = vcmp.eq.s32.totalorder %v1178, 1
        %vm1195 = vcmp.eq.s32.totalorder %v1179, 1
        %vm1196 = vcmp.eq.s32.totalorder %v1180, 1
        %vm1197 = vcmp.eq.s32.totalorder %v1181, 1
        %vm1198 = vcmp.eq.s32.totalorder %v1182, 1
        %v1199 = vsel %vm1183, %v1127, -inf
        %v1200 = vsel %vm1184, %v1129, -inf
        %v1201 = vsel %vm1185, %v1132, -inf
        %v1202 = vsel %vm1186, %v1134, -inf
        %v1203 = vsel %vm1187, %v1137, -inf
        %v1204 = vsel %vm1188, %v1139, -inf
        %v1205 = vsel %vm1189, %v1142, -inf
        %v1206 = vsel %vm1190, %v1144, -inf
        %v1207 = vsel %vm1191, %v1147, -inf
        %v1208 = vsel %vm1192, %v1149, -inf
        %v1209 = vsel %vm1193, %v1152, -inf
        %v1210 = vsel %vm1194, %v1154, -inf
        %v1211 = vsel %vm1195, %v1157, -inf
        %v1212 = vsel %vm1196, %v1159, -inf
        %v1213 = vsel %vm1197, %v1162, -inf
        %v1214 = vsel %vm1198, %v1164, -inf
        %v1215 = vmax.f32 %v1199, %v1203
        %v1216 = vmax.f32 %v1200, %v1204
        %v1217 = vmax.f32 %v1201, %v1205
        %v1218 = vmax.f32 %v1202, %v1206
        %v1219 = vmax.f32 %v1215, %v1207
        %v1220 = vmax.f32 %v1216, %v1208
        %v1221 = vmax.f32 %v1217, %v1209
        %v1222 = vmax.f32 %v1218, %v1210
        %v1223 = vmax.f32 %v1219, %v1211
        %v1224 = vmax.f32 %v1220, %v1212
        %v1225 = vmax.f32 %v1221, %v1213
        %v1226 = vmax.f32 %v1222, %v1214
        %v1227 = vmax.f32 %v1223, %v1224
        %v1228 = vmax.f32 %v1225, %v1226
        %v1229 = vmax.f32 %v1227, %v1228
        %v1230 = vrot.slane %v1229, 4
        %v1231 = vmax.f32 %v1229, %v1230
        %v1232 = vrot.slane %v1231, 2
        %v1233 = vmax.f32 %v1231, %v1232
        %v1234 = vrot.slane %v1233, 1
        %v1235 = vmax.f32 %v1233, %v1234
        %v1236 = vmax.f32 %v1166, %v1235
        %1237 = vst [vmem:[%s540] sm:$0x1] %v1236
        %v1238 = vld [vmem:[%s7] sm:$0xf]
        %v1239 = vld [vmem:[%s7 + $0x4] sm:$0xf]
        %v1240 = vld [vmem:[%s7 + $0x8] sm:$0xf]
        %v1241 = vld [vmem:[%s7 + $0xc] sm:$0xf]
        %v1242 = vld [vmem:[%s7 + $0x10] sm:$0xf]
        %v1243 = vld [vmem:[%s7 + $0x14] sm:$0xf]
        %v1244 = vld [vmem:[%s7 + $0x18] sm:$0xf]
        %v1245 = vld [vmem:[%s7 + $0x1c] sm:$0xf]
        %v1246 = vld [vmem:[%s7 + $0x20] sm:$0xf]
        %v1247 = vld [vmem:[%s7 + $0x24] sm:$0xf]
        %v1248 = vld [vmem:[%s7 + $0x28] sm:$0xf]
        %v1249 = vld [vmem:[%s7 + $0x2c] sm:$0xf]
        %v1250 = vld [vmem:[%s7 + $0x30] sm:$0xf]
        %v1251 = vld [vmem:[%s7 + $0x34] sm:$0xf]
        %v1252 = vld [vmem:[%s7 + $0x38] sm:$0xf]
        %v1253 = vld [vmem:[%s7 + $0x3c] sm:$0xf]
        %v1254 = vld [vmem:[%s8] sm:$0x1]
        %v1256 = vperm.slane %v1254, 0
        %v1258 = vunpack.c.h.b16 %v793
        %v1259 = vunpack.c.h.b16 %v794
        %v1260 = vunpack.c.h.b16 %v795
        %v1261 = vunpack.c.h.b16 %v796
        %v1262 = vunpack.c.h.b16 %v797
        %v1263 = vunpack.c.h.b16 %v798
        %v1264 = vunpack.c.h.b16 %v799
        %v1265 = vunpack.c.h.b16 %v800
        %v1266 = vunpack.c.h.b16 %v801
        %v1267 = vunpack.c.h.b16 %v802
        %v1268 = vunpack.c.h.b16 %v803
        %v1269 = vunpack.c.h.b16 %v804
        %v1270 = vunpack.c.h.b16 %v805
        %v1271 = vunpack.c.h.b16 %v806
        %v1272 = vunpack.c.h.b16 %v807
        %v1273 = vunpack.c.h.b16 %v808
        %v1274 = vpack.c.b16 %v1259, %v1258
        %v1275 = vpack.c.b16 %v1261, %v1260
        %v1276 = vpack.c.b16 %v1263, %v1262
        %v1277 = vpack.c.b16 %v1265, %v1264
        %v1278 = vpack.c.b16 %v1267, %v1266
        %v1279 = vpack.c.b16 %v1269, %v1268
        %v1280 = vpack.c.b16 %v1271, %v1270
        %v1281 = vpack.c.b16 %v1273, %v1272
        %v1306 = vunpack.c.l.b16 %v1238
        %v1307 = vunpack.c.l.b16 %v1239
        %v1308 = vunpack.c.l.b16 %v1240
        %v1309 = vunpack.c.l.b16 %v1241
        %v1310 = vunpack.c.l.b16 %v1242
        %v1311 = vunpack.c.l.b16 %v1243
        %v1312 = vunpack.c.l.b16 %v1244
        %v1313 = vunpack.c.l.b16 %v1245
        %v1314 = vunpack.c.l.b16 %v1246
        %v1315 = vunpack.c.l.b16 %v1247
        %v1316 = vunpack.c.l.b16 %v1248
        %v1317 = vunpack.c.l.b16 %v1249
        %v1318 = vunpack.c.l.b16 %v1250
        %v1319 = vunpack.c.l.b16 %v1251
        %v1320 = vunpack.c.l.b16 %v1252
        %v1321 = vunpack.c.l.b16 %v1253
        %v1322 = vpack.c.b16 %v1307, %v1306
        %v1323 = vpack.c.b16 %v1309, %v1308
        %v1324 = vpack.c.b16 %v1311, %v1310
        %v1325 = vpack.c.b16 %v1313, %v1312
        %v1326 = vpack.c.b16 %v1315, %v1314
        %v1327 = vpack.c.b16 %v1317, %v1316
        %v1328 = vpack.c.b16 %v1319, %v1318
        %v1329 = vpack.c.b16 %v1321, %v1320
        %1338 = vmatpush.bf16.msra.mxu0 %v1329
        %1339 = vmatpush.bf16.msra.mxu0 %v1328
        %1340 = vmatpush.bf16.msra.mxu0 %v1327
        %1341 = vmatpush.bf16.msra.mxu0 %v1326
        %1342 = vmatpush.bf16.msra.mxu0 %v1325
        %1343 = vmatpush.bf16.msra.mxu0 %v1324
        %1344 = vmatpush.bf16.msra.mxu0 %v1323
        %1345 = vmatpush.bf16.msra.mxu0 %v1322
        %1346 = vmatmul.bf16.gmra.mxu0 %v1274
        %v1347 = vpop.f32.mrf.mxu0
        %v1348 = vadd.f32 %v1256, %v1347
        %v1349 = vpop.f32.mrf.mxu0
        %v1350 = vadd.f32 %v1256, %v1349
        %1351 = vmatmul.bf16.gmra.mxu0 %v1275
        %v1352 = vpop.f32.mrf.mxu0
        %v1353 = vadd.f32 %v1256, %v1352
        %v1354 = vpop.f32.mrf.mxu0
        %v1355 = vadd.f32 %v1256, %v1354
        %1356 = vmatmul.bf16.gmra.mxu0 %v1276
        %v1357 = vpop.f32.mrf.mxu0
        %v1358 = vadd.f32 %v1256, %v1357
        %v1359 = vpop.f32.mrf.mxu0
        %v1360 = vadd.f32 %v1256, %v1359
        %1361 = vmatmul.bf16.gmra.mxu0 %v1277
        %v1362 = vpop.f32.mrf.mxu0
        %v1363 = vadd.f32 %v1256, %v1362
        %v1364 = vpop.f32.mrf.mxu0
        %v1365 = vadd.f32 %v1256, %v1364
        %1366 = vmatmul.bf16.gmra.mxu0 %v1278
        %v1367 = vpop.f32.mrf.mxu0
        %v1368 = vadd.f32 %v1256, %v1367
        %v1369 = vpop.f32.mrf.mxu0
        %v1370 = vadd.f32 %v1256, %v1369
        %1371 = vmatmul.bf16.gmra.mxu0 %v1279
        %v1372 = vpop.f32.mrf.mxu0
        %v1373 = vadd.f32 %v1256, %v1372
        %v1374 = vpop.f32.mrf.mxu0
        %v1375 = vadd.f32 %v1256, %v1374
        %1376 = vmatmul.bf16.gmra.mxu0 %v1280
        %v1377 = vpop.f32.mrf.mxu0
        %v1378 = vadd.f32 %v1256, %v1377
        %v1379 = vpop.f32.mrf.mxu0
        %v1380 = vadd.f32 %v1256, %v1379
        %1381 = vmatmul.bf16.gmra.mxu0 %v1281
        %v1382 = vpop.f32.mrf.mxu0
        %v1383 = vadd.f32 %v1256, %v1382
        %v1384 = vpop.f32.mrf.mxu0
        %v1385 = vadd.f32 %v1256, %v1384
        %1386 = vdwg.mxu0
        %v1387 = vmax.f32 %v1348, 0.0
        %v1388 = vmax.f32 %v1350, 0.0
        %v1389 = vmax.f32 %v1353, 0.0
        %v1390 = vmax.f32 %v1355, 0.0
        %v1391 = vmax.f32 %v1358, 0.0
        %v1392 = vmax.f32 %v1360, 0.0
        %v1393 = vmax.f32 %v1363, 0.0
        %v1394 = vmax.f32 %v1365, 0.0
        %v1395 = vmax.f32 %v1368, 0.0
        %v1396 = vmax.f32 %v1370, 0.0
        %v1397 = vmax.f32 %v1373, 0.0
        %v1398 = vmax.f32 %v1375, 0.0
        %v1399 = vmax.f32 %v1378, 0.0
        %v1400 = vmax.f32 %v1380, 0.0
        %v1401 = vmax.f32 %v1383, 0.0
        %v1402 = vmax.f32 %v1385, 0.0
        %v1403 = vpack.c.bf16 %v1388, %v1387
        %v1404 = vpack.c.bf16 %v1390, %v1389
        %v1405 = vpack.c.bf16 %v1392, %v1391
        %v1406 = vpack.c.bf16 %v1394, %v1393
        %v1407 = vpack.c.bf16 %v1396, %v1395
        %v1408 = vpack.c.bf16 %v1398, %v1397
        %v1409 = vpack.c.bf16 %v1400, %v1399
        %v1410 = vpack.c.bf16 %v1402, %v1401
        %v1411 = vld [vmem:[%s9] sm:$0xf]
        %v1412 = vld [vmem:[%s9 + $0x4] sm:$0xf]
        %v1413 = vld [vmem:[%s9 + $0x8] sm:$0xf]
        %v1414 = vld [vmem:[%s9 + $0xc] sm:$0xf]
        %v1415 = vld [vmem:[%s9 + $0x10] sm:$0xf]
        %v1416 = vld [vmem:[%s9 + $0x14] sm:$0xf]
        %v1417 = vld [vmem:[%s9 + $0x18] sm:$0xf]
        %v1418 = vld [vmem:[%s9 + $0x1c] sm:$0xf]
        %v1419 = vld [vmem:[%s9 + $0x20] sm:$0xf]
        %v1420 = vld [vmem:[%s9 + $0x24] sm:$0xf]
        %v1421 = vld [vmem:[%s9 + $0x28] sm:$0xf]
        %v1422 = vld [vmem:[%s9 + $0x2c] sm:$0xf]
        %v1423 = vld [vmem:[%s9 + $0x30] sm:$0xf]
        %v1424 = vld [vmem:[%s9 + $0x34] sm:$0xf]
        %v1425 = vld [vmem:[%s9 + $0x38] sm:$0xf]
        %v1426 = vld [vmem:[%s9 + $0x3c] sm:$0xf]
        %v1427 = vld [vmem:[%s10] sm:$0x1]
        %v1429 = vperm.slane %v1427, 0
        %v1447 = vunpack.c.l.b16 %v1411
        %v1448 = vunpack.c.l.b16 %v1412
        %v1449 = vunpack.c.l.b16 %v1413
        %v1450 = vunpack.c.l.b16 %v1414
        %v1451 = vunpack.c.l.b16 %v1415
        %v1452 = vunpack.c.l.b16 %v1416
        %v1453 = vunpack.c.l.b16 %v1417
        %v1454 = vunpack.c.l.b16 %v1418
        %v1455 = vunpack.c.l.b16 %v1419
        %v1456 = vunpack.c.l.b16 %v1420
        %v1457 = vunpack.c.l.b16 %v1421
        %v1458 = vunpack.c.l.b16 %v1422
        %v1459 = vunpack.c.l.b16 %v1423
        %v1460 = vunpack.c.l.b16 %v1424
        %v1461 = vunpack.c.l.b16 %v1425
        %v1462 = vunpack.c.l.b16 %v1426
        %v1463 = vpack.c.b16 %v1448, %v1447
        %v1464 = vpack.c.b16 %v1450, %v1449
        %v1465 = vpack.c.b16 %v1452, %v1451
        %v1466 = vpack.c.b16 %v1454, %v1453
        %v1467 = vpack.c.b16 %v1456, %v1455
        %v1468 = vpack.c.b16 %v1458, %v1457
        %v1469 = vpack.c.b16 %v1460, %v1459
        %v1470 = vpack.c.b16 %v1462, %v1461
        %1479 = vmatpush.bf16.msra.mxu0 %v1470
        %1480 = vmatpush.bf16.msra.mxu0 %v1469
        %1481 = vmatpush.bf16.msra.mxu0 %v1468
        %1482 = vmatpush.bf16.msra.mxu0 %v1467
        %1483 = vmatpush.bf16.msra.mxu0 %v1466
        %1484 = vmatpush.bf16.msra.mxu0 %v1465
        %1485 = vmatpush.bf16.msra.mxu0 %v1464
        %1486 = vmatpush.bf16.msra.mxu0 %v1463
        %1487 = vmatmul.bf16.gmra.mxu0 %v1403
        %v1488 = vpop.f32.mrf.mxu0
        %v1489 = vadd.f32 %v1429, %v1488
        %v1490 = vpop.f32.mrf.mxu0
        %v1491 = vadd.f32 %v1429, %v1490
        %1492 = vmatmul.bf16.gmra.mxu0 %v1404
        %v1493 = vpop.f32.mrf.mxu0
        %v1494 = vadd.f32 %v1429, %v1493
        %v1495 = vpop.f32.mrf.mxu0
        %v1496 = vadd.f32 %v1429, %v1495
        %1497 = vmatmul.bf16.gmra.mxu0 %v1405
        %v1498 = vpop.f32.mrf.mxu0
        %v1499 = vadd.f32 %v1429, %v1498
        %v1500 = vpop.f32.mrf.mxu0
        %v1501 = vadd.f32 %v1429, %v1500
        %1502 = vmatmul.bf16.gmra.mxu0 %v1406
        %v1503 = vpop.f32.mrf.mxu0
        %v1504 = vadd.f32 %v1429, %v1503
        %v1505 = vpop.f32.mrf.mxu0
        %v1506 = vadd.f32 %v1429, %v1505
        %1507 = vmatmul.bf16.gmra.mxu0 %v1407
        %v1508 = vpop.f32.mrf.mxu0
        %v1509 = vadd.f32 %v1429, %v1508
        %v1510 = vpop.f32.mrf.mxu0
        %v1511 = vadd.f32 %v1429, %v1510
        %1512 = vmatmul.bf16.gmra.mxu0 %v1408
        %v1513 = vpop.f32.mrf.mxu0
        %v1514 = vadd.f32 %v1429, %v1513
        %v1515 = vpop.f32.mrf.mxu0
        %v1516 = vadd.f32 %v1429, %v1515
        %1517 = vmatmul.bf16.gmra.mxu0 %v1409
        %v1518 = vpop.f32.mrf.mxu0
        %v1519 = vadd.f32 %v1429, %v1518
        %v1520 = vpop.f32.mrf.mxu0
        %v1521 = vadd.f32 %v1429, %v1520
        %1522 = vmatmul.bf16.gmra.mxu0 %v1410
        %v1523 = vpop.f32.mrf.mxu0
        %v1524 = vadd.f32 %v1429, %v1523
        %v1525 = vpop.f32.mrf.mxu0
        %v1526 = vadd.f32 %v1429, %v1525
        %1527 = vdwg.mxu0
        %v1528 = vmax.f32 %v1489, 0.0
        %v1529 = vmax.f32 %v1491, 0.0
        %v1530 = vmax.f32 %v1494, 0.0
        %v1531 = vmax.f32 %v1496, 0.0
        %v1532 = vmax.f32 %v1499, 0.0
        %v1533 = vmax.f32 %v1501, 0.0
        %v1534 = vmax.f32 %v1504, 0.0
        %v1535 = vmax.f32 %v1506, 0.0
        %v1536 = vmax.f32 %v1509, 0.0
        %v1537 = vmax.f32 %v1511, 0.0
        %v1538 = vmax.f32 %v1514, 0.0
        %v1539 = vmax.f32 %v1516, 0.0
        %v1540 = vmax.f32 %v1519, 0.0
        %v1541 = vmax.f32 %v1521, 0.0
        %v1542 = vmax.f32 %v1524, 0.0
        %v1543 = vmax.f32 %v1526, 0.0
        %v1544 = vld [vmem:[#allocation2] sm:$0x1]
        %v1545 = vsel %vm1183, %v1528, -inf
        %v1546 = vsel %vm1184, %v1529, -inf
        %v1547 = vsel %vm1185, %v1530, -inf
        %v1548 = vsel %vm1186, %v1531, -inf
        %v1549 = vsel %vm1187, %v1532, -inf
        %v1550 = vsel %vm1188, %v1533, -inf
        %v1551 = vsel %vm1189, %v1534, -inf
        %v1552 = vsel %vm1190, %v1535, -inf
        %v1553 = vsel %vm1191, %v1536, -inf
        %v1554 = vsel %vm1192, %v1537, -inf
        %v1555 = vsel %vm1193, %v1538, -inf
        %v1556 = vsel %vm1194, %v1539, -inf
        %v1557 = vsel %vm1195, %v1540, -inf
        %v1558 = vsel %vm1196, %v1541, -inf
        %v1559 = vsel %vm1197, %v1542, -inf
        %v1560 = vsel %vm1198, %v1543, -inf
        %v1561 = vmax.f32 %v1545, %v1549
        %v1562 = vmax.f32 %v1546, %v1550
        %v1563 = vmax.f32 %v1547, %v1551
        %v1564 = vmax.f32 %v1548, %v1552
        %v1565 = vmax.f32 %v1561, %v1553
        %v1566 = vmax.f32 %v1562, %v1554
        %v1567 = vmax.f32 %v1563, %v1555
        %v1568 = vmax.f32 %v1564, %v1556
        %v1569 = vmax.f32 %v1565, %v1557
        %v1570 = vmax.f32 %v1566, %v1558
        %v1571 = vmax.f32 %v1567, %v1559
        %v1572 = vmax.f32 %v1568, %v1560
        %v1573 = vmax.f32 %v1569, %v1570
        %v1574 = vmax.f32 %v1571, %v1572
        %v1575 = vmax.f32 %v1573, %v1574
        %v1576 = vrot.slane %v1575, 4
        %v1577 = vmax.f32 %v1575, %v1576
        %v1578 = vrot.slane %v1577, 2
        %v1579 = vmax.f32 %v1577, %v1578
        %v1580 = vrot.slane %v1579, 1
        %v1581 = vmax.f32 %v1579, %v1580
        %v1582 = vmax.f32 %v1544, %v1581
        %1583 = vst [vmem:[#allocation2] sm:$0x1] %v1582
        %p1584 = scmp.eq.s32.totalorder %s39, 1
        // Predicated region
        $region85: #{tpu_custom_call.1} parent=79 // pred_check
          %p1585 = pneg %p1584
        $region86: #{tpu_custom_call.1} parent=79 // pred_check_branch
          %1587 = sbr.rel (%p1585) target = $region88
        $region87: #{tpu_custom_call.1} parent=79 // pred_region
          %v1588 = vld [vmem:[#allocation2] sm:$0x1]
          %v1589 = vpack.c.bf16 %v1588, %v1588
          %v1590 = vld [vmem:[%s11] sm:$0xf]
          %v1591 = vld [vmem:[%s11 + $0x4] sm:$0xf]
          %v1592 = vld [vmem:[%s11 + $0x8] sm:$0xf]
          %v1593 = vld [vmem:[%s11 + $0xc] sm:$0xf]
          %v1594 = vld [vmem:[%s11 + $0x10] sm:$0xf]
          %v1595 = vld [vmem:[%s11 + $0x14] sm:$0xf]
          %v1596 = vld [vmem:[%s11 + $0x18] sm:$0xf]
          %v1597 = vld [vmem:[%s11 + $0x1c] sm:$0xf]
          %v1598 = vld [vmem:[%s11 + $0x20] sm:$0xf]
          %v1599 = vld [vmem:[%s11 + $0x24] sm:$0xf]
          %v1600 = vld [vmem:[%s11 + $0x28] sm:$0xf]
          %v1601 = vld [vmem:[%s11 + $0x2c] sm:$0xf]
          %v1602 = vld [vmem:[%s11 + $0x30] sm:$0xf]
          %v1603 = vld [vmem:[%s11 + $0x34] sm:$0xf]
          %v1604 = vld [vmem:[%s11 + $0x38] sm:$0xf]
          %v1605 = vld [vmem:[%s11 + $0x3c] sm:$0xf]
          %v1606 = vld [vmem:[%s12] sm:$0x1]
          %v1623 = vunpack.c.l.b16 %v1590
          %v1624 = vunpack.c.l.b16 %v1591
          %v1625 = vunpack.c.l.b16 %v1592
          %v1626 = vunpack.c.l.b16 %v1593
          %v1627 = vunpack.c.l.b16 %v1594
          %v1628 = vunpack.c.l.b16 %v1595
          %v1629 = vunpack.c.l.b16 %v1596
          %v1630 = vunpack.c.l.b16 %v1597
          %v1631 = vunpack.c.l.b16 %v1598
          %v1632 = vunpack.c.l.b16 %v1599
          %v1633 = vunpack.c.l.b16 %v1600
          %v1634 = vunpack.c.l.b16 %v1601
          %v1635 = vunpack.c.l.b16 %v1602
          %v1636 = vunpack.c.l.b16 %v1603
          %v1637 = vunpack.c.l.b16 %v1604
          %v1638 = vunpack.c.l.b16 %v1605
          %v1639 = vpack.c.b16 %v1624, %v1623
          %v1640 = vpack.c.b16 %v1626, %v1625
          %v1641 = vpack.c.b16 %v1628, %v1627
          %v1642 = vpack.c.b16 %v1630, %v1629
          %v1643 = vpack.c.b16 %v1632, %v1631
          %v1644 = vpack.c.b16 %v1634, %v1633
          %v1645 = vpack.c.b16 %v1636, %v1635
          %v1646 = vpack.c.b16 %v1638, %v1637
          %1655 = vmatpush.bf16.msra.mxu0 %v1646
          %1656 = vmatpush.bf16.msra.mxu0 %v1645
          %1657 = vmatpush.bf16.msra.mxu0 %v1644
          %1658 = vmatpush.bf16.msra.mxu0 %v1643
          %1659 = vmatpush.bf16.msra.mxu0 %v1642
          %1660 = vmatpush.bf16.msra.mxu0 %v1641
          %1661 = vmatpush.bf16.msra.mxu0 %v1640
          %1662 = vmatpush.bf16.msra.mxu0 %v1639
          %1663 = vmatmul.bf16.gmra.mxu0 %v1589
          %v1664 = vpop.f32.mrf.mxu0
          %v1665 = vadd.f32 %v1606, %v1664
          %v1666 = vpop.f32.mrf.mxu0
          %1667 = vdwg.mxu0
          %v1668 = vmax.f32 %v1665, 0.0
          %v1669 = vpack.c.bf16 %v1668, %v1668
          %v1670 = vld [vmem:[%s13] sm:$0xf]
          %v1671 = vld [vmem:[%s13 + $0x4] sm:$0xf]
          %v1672 = vld [vmem:[%s13 + $0x8] sm:$0xf]
          %v1673 = vld [vmem:[%s13 + $0xc] sm:$0xf]
          %v1674 = vld [vmem:[%s13 + $0x10] sm:$0xf]
          %v1675 = vld [vmem:[%s13 + $0x14] sm:$0xf]
          %v1676 = vld [vmem:[%s13 + $0x18] sm:$0xf]
          %v1677 = vld [vmem:[%s13 + $0x1c] sm:$0xf]
          %v1678 = vld [vmem:[%s14] sm:$0x1]
          %v1687 = vunpack.c.l.b16 %v1670
          %v1688 = vunpack.c.l.b16 %v1671
          %v1689 = vunpack.c.l.b16 %v1672
          %v1690 = vunpack.c.l.b16 %v1673
          %v1691 = vunpack.c.l.b16 %v1674
          %v1692 = vunpack.c.l.b16 %v1675
          %v1693 = vunpack.c.l.b16 %v1676
          %v1694 = vunpack.c.l.b16 %v1677
          %v1695 = vpack.c.b16 %v1688, %v1687
          %v1696 = vpack.c.b16 %v1690, %v1689
          %v1697 = vpack.c.b16 %v1692, %v1691
          %v1698 = vpack.c.b16 %v1694, %v1693
          %vm1703 = vcmask 523264
          %v1705 = vsel %vm1703, %v1669, 0
          %1707 = vmatpush.bf16.msra.mxu0 0
          %1708 = vmatpush.bf16.msra.mxu0 0
          %1709 = vmatpush.bf16.msra.mxu0 0
          %1710 = vmatpush.bf16.msra.mxu0 0
          %1711 = vmatpush.bf16.msra.mxu0 %v1698
          %1712 = vmatpush.bf16.msra.mxu0 %v1697
          %1713 = vmatpush.bf16.msra.mxu0 %v1696
          %1714 = vmatpush.bf16.msra.mxu0 %v1695
          %1715 = vmatmul.bf16.gmra.mxu0 %v1705
          %v1716 = vpop.f32.mrf.mxu0
          %v1717 = vadd.f32 %v1678, %v1716
          %v1718 = vpop.f32.mrf.mxu0
          %1719 = vdwg.mxu0
          %1720 = vst [vmem:[%s546] sm:$0x1] %v1717
        $region88: #{tpu_custom_call.1} parent=79 // pred_fallthru
          _
        %s1721 = sand.u32 %s376, 1
        %s1722 = scalar_lea.sflag [#allocation4], %s1721
        %s1723 = sand.u32 %s376, 1
        %s1724 = scalar_lea.vmem [#allocation3], %s1723
        %s1725 = sand.u32 %s402, 1
        %s1726 = scalar_lea.sflag [#allocation6], %s1725
        %s1727 = sand.u32 %s402, 1
        %s1728 = scalar_lea.vmem [#allocation5], %s1727
        // Predicated region
        $region89: #{tpu_custom_call.1} parent=79 // pred_check
          %p1729 = pneg %p386
        $region90: #{tpu_custom_call.1} parent=79 // pred_check_branch
          %1731 = sbr.rel (%p1729) target = $region92
        $region91: #{tpu_custom_call.1} parent=79 // pred_region
          %1733 = vsyncadd %s1722, 0
          %s1734 = scalar_lea.hbm %s15, %s38
          %s1736 = sshll.u32 %s1724, 4
          %s1737 = int_to_ptr.vmem [resolvable:$true] %s1736
          %s1738 = sshll.u32 %s1734, 4
          %s1739 = int_to_ptr.hbm [resolvable:$true] %s1738
          %1741 = dma.vmem_to_hbm [thread:$0]  %s1737, 16, %s1739, %s1722
        $region92: #{tpu_custom_call.1} parent=79 // pred_fallthru
          _
        // Predicated region
        $region93: #{tpu_custom_call.1} parent=79 // pred_check
          %p1742 = pneg %p412
        $region94: #{tpu_custom_call.1} parent=79 // pred_check_branch
          %1744 = sbr.rel (%p1742) target = $region96
        $region95: #{tpu_custom_call.1} parent=79 // pred_region
          %1746 = vsyncadd %s1726, 0
          %s1747 = scalar_lea.hbm %s16, %s38
          %s1749 = sshll.u32 %s1728, 4
          %s1750 = int_to_ptr.vmem [resolvable:$true] %s1749
          %s1751 = sshll.u32 %s1747, 4
          %s1752 = int_to_ptr.hbm [resolvable:$true] %s1751
          %1754 = dma.vmem_to_hbm [thread:$0]  %s1750, 16, %s1752, %s1726
        $region96: #{tpu_custom_call.1} parent=79 // pred_fallthru
          _
      $region80: #{tpu_custom_call.1} parent=5 // pred_fallthru
        _
      %p1755 = scmp.le.s32.totalorder 2, %s29
      // Predicated region
      $region97: #{tpu_custom_call.1} parent=5 // pred_check
        %p1756 = pneg %p1755
      $region98: #{tpu_custom_call.1} parent=5 // pred_check_branch
        %1758 = sbr.rel (%p1756) target = $region100
      $region99: #{tpu_custom_call.1} parent=5 // pred_region
        %s1759 = ssub.s32 %s29, 2
        // Predicated region
        $region101: #{tpu_custom_call.1} parent=99 // pred_check
          %p1760 = pneg %p392
        $region102: #{tpu_custom_call.1} parent=99 // pred_check_branch
          %1762 = sbr.rel (%p1760) target = $region104
        $region103: #{tpu_custom_call.1} parent=99 // pred_region
          %s1763 = sand.u32 %s377, 1
          %s1764 = scalar_lea.sflag [#allocation4], %s1763
          %s1765 = sand.u32 %s377, 1
          %s1766 = scalar_lea.vmem [#allocation3], %s1765
          %1768 = dma.done %s1764, 16
        $region104: #{tpu_custom_call.1} parent=99 // pred_fallthru
          _
        // Predicated region
        $region105: #{tpu_custom_call.1} parent=99 // pred_check
          %p1769 = pneg %p418
        $region106: #{tpu_custom_call.1} parent=99 // pred_check_branch
          %1771 = sbr.rel (%p1769) target = $region108
        $region107: #{tpu_custom_call.1} parent=99 // pred_region
          %s1772 = sand.u32 %s403, 1
          %s1773 = scalar_lea.sflag [#allocation6], %s1772
          %s1774 = sand.u32 %s403, 1
          %s1775 = scalar_lea.vmem [#allocation5], %s1774
          %1777 = dma.done %s1773, 16
        $region108: #{tpu_custom_call.1} parent=99 // pred_fallthru
          _
      $region100: #{tpu_custom_call.1} parent=5 // pred_fallthru
        _
    $region6: #{tpu_custom_call.1} parent=1 // loop_footer
      %s33 = sadd.s32 1, %s29
    $region7: #{tpu_custom_call.1} parent=1 // loop_footer_branch
      %28 = sbr.rel target = $region3
    $region8: #{tpu_custom_call.1} parent=1 // loop_exit
      _
    %1778 = vsyncpa [#allocation4], 1
    %s1779 = scalar_lea.sflag [#allocation4], 1
    %1780 = vsyncpa %s1779, 1
    %1781 = vsyncpa [#allocation6], 1
    %s1782 = scalar_lea.sflag [#allocation6], 1
    %1783 = vsyncpa %s1782, 1

</llo_original>
